<compile_context>
chip_gen: v6e
topology: v6e:2x2x1
jax: 0.10.0
libtpu: 0.0.40
codegen_flags: <defaults>
</compile_context>

<pallas_src>
import numpy as np
import jax
import jax.numpy as jnp
from jax.experimental import pallas as pl
from jax.experimental.pallas import tpu as pltpu

# ----------------------------- config ------------------------------------
B = 2            # batch (test size)
T = 8            # frames (test size)
D = 32           # shared output dim (content/melody/loudness/singer)
WHISPER_DIM = 64
CONTENTVEC_DIM = 48
N_BINS_MELODY = 256
N_BINS_LOUDNESS = 256
SINGER_TABLE_SIZE = 16
F0_MIN = 50.0
F0_MAX = 1100.0
LOUDNESS_MIN = 1e-30
LOUDNESS_MAX = 1.5

F0_MEL_MIN = 1127.0 * float(np.log(1.0 + F0_MIN / 700.0))
F0_MEL_MAX = 1127.0 * float(np.log(1.0 + F0_MAX / 700.0))

SCALAR_ROWS = 8                                               # packed scalar slab rows
CONTENT_K = WHISPER_DIM + CONTENTVEC_DIM + SINGER_TABLE_SIZE  # 128
EMB_K = N_BINS_MELODY + N_BINS_LOUDNESS                       # 512
FUSED_K = EMB_K + CONTENT_K                                   # 640

LANE = 128      # lane width: minimum frame tile
MAX_TN = 512    # frames per grid step at realistic T (review: 512-1024 sweet spot)

N = B * T


def _round_up(x, m):
    return ((x + m - 1) // m) * m


# ----------------------------- kernel ------------------------------------
def condition_encoder_kernel(
    scalars_ref,    # (8, TN)   f32 : rows [pitch ; uv ; energy ; pad...]
    content_ref,    # (128, TN) bf16: [whisper ; contentvec ; spk one-hot] (feature-major)
    w_all_ref,      # (D, 640)  bf16: [mel_emb.T | loud_emb.T | w_wh.T | w_cv.T | singer_emb.T]
    uv_emb_t_ref,   # (D, 2)    f32
    loud_bins_ref,  # (256, 1)  f32 : 255 real boundaries + one +inf sentinel
    b_ref,          # (D, 1)    f32 : (b_wh + b_cv).T
    out_ref,        # (D, TN)   f32 : lane-dense output slab (transposed back in wrapper)
    lhs_ref,        # (640, TN) bf16 scratch: fused GEMM LHS
):
    tn = scalars_ref.shape[1]
    f0 = scalars_ref[0:1, :]                              # (1, tn)
    uv = scalars_ref[1:2, :]
    energy = scalars_ref[2:3, :]

    # ---- MelodyEncoder: f0_to_coarse -> pitch bin index in [1, 255] ----
    f0_mel = 1127.0 * jnp.log1p(f0 / 700.0)
    scaled = (f0_mel - F0_MEL_MIN) * (N_BINS_MELODY - 2) / (F0_MEL_MAX - F0_MEL_MIN) + 1.0
    f0_mel = jnp.where(f0_mel > 0.0, scaled, f0_mel)
    f0_mel = jnp.where(f0_mel <= 1.0, 1.0, f0_mel)
    f0_mel = jnp.where(f0_mel > float(N_BINS_MELODY - 1), float(N_BINS_MELODY - 1), f0_mel)
    pitch_idx = (f0_mel + 0.5).astype(jnp.int32)          # (1, tn)

    # ---- LoudnessEncoder: torch.bucketize(right=False) == count(bins < v) ----
    # bins is (256, 1); the +inf sentinel never satisfies energy > bin.
    bins = loud_bins_ref[...]
    loud_idx = jnp.sum((energy > bins).astype(jnp.int32), axis=0, keepdims=True)  # (1, tn) in [0,255]

    # ---- build fused GEMM LHS in bf16 scratch ----
    # One 256-wide iota reused for both one-hot halves; compares stay in int32
    # (v5e VPU has no bf16 ALU), single cast to bf16 at the end (exact 0/1).
    iota = jax.lax.broadcasted_iota(jnp.int32, (N_BINS_MELODY, tn), 0)
    lhs_ref[0:N_BINS_MELODY, :] = (iota == pitch_idx).astype(jnp.bfloat16)
    lhs_ref[N_BINS_MELODY:EMB_K, :] = (iota == loud_idx).astype(jnp.bfloat16)
    lhs_ref[EMB_K:FUSED_K, :] = content_ref[...]

    # ---- single K=640 MXU pass: (D,640) @ (640,TN) -> (D,TN) f32 ----
    acc = jnp.dot(w_all_ref[...], lhs_ref[...], preferred_element_type=jnp.float32)

    # ---- uv embedding as a VPU select over the 2-column transposed table ----
    uv_out = jnp.where(uv > 0.5, uv_emb_t_ref[:, 1:2], uv_emb_t_ref[:, 0:1])   # (D, tn)

    # ---- merge_mode == 'add': lane-dense store ----
    out_ref[...] = acc + uv_out + b_ref[...]


# ----------------------------- param fusion (done ONCE) --------------------
def prepare_params(params):
    """Fuse / transpose / cast parameters once; not per forward call."""
    w_all = jnp.concatenate(
        [params["mel_emb"], params["loud_emb"], params["w_wh"], params["w_cv"],
         params["singer_emb"]], axis=0).T.astype(jnp.bfloat16)          # (D, 640)
    uv_emb_t = params["uv_emb"].T.astype(jnp.float32)                   # (D, 2)
    loud_bins = jnp.concatenate(
        [params["loud_bins"].reshape(-1),
         jnp.array([jnp.inf], jnp.float32)]).reshape(N_BINS_LOUDNESS, 1)  # (256, 1)
    b_t = (params["b_wh"] + params["b_cv"]).reshape(D, 1)                # (D, 1)
    return {"w_all": w_all, "uv_emb_t": uv_emb_t, "loud_bins": loud_bins, "b_t": b_t}


# ----------------------------- wrapper ------------------------------------
def condition_encoder(pitch, uv, energy, whisper, cv, spk_ids, fused):
    """pitch/uv/energy: [N] f32; whisper: [N,64]; cv: [N,48]; spk_ids: [N] int32.
    Returns [N, D] f32."""
    n = pitch.shape[0]
    tn = min(MAX_TN, _round_up(n, LANE))
    n_pad = _round_up(n, tn)
    pad = n_pad - n

    # ---- layout plumbing: feature-major (transposed) inputs, frame axis on lanes ----
    spk_oh = jax.nn.one_hot(spk_ids, SINGER_TABLE_SIZE, dtype=jnp.float32)      # (n, 16)
    content_t = jnp.concatenate([whisper, cv, spk_oh], axis=1).T.astype(jnp.bfloat16)  # (128, n)
    scalars_t = jnp.concatenate(
        [jnp.stack([pitch, uv, energy], axis=0),
         jnp.zeros((SCALAR_ROWS - 3, n), jnp.float32)], axis=0)                  # (8, n)
    if pad:
        content_t = jnp.pad(content_t, ((0, 0), (0, pad)))
        scalars_t = jnp.pad(scalars_t, ((0, 0), (0, pad)))

    out_t = pl.pallas_call(
        condition_encoder_kernel,
        out_shape=jax.ShapeDtypeStruct((D, n_pad), jnp.float32),
        grid=(n_pad // tn,),
        in_specs=[
            pl.BlockSpec((SCALAR_ROWS, tn), lambda i: (0, i)),       # packed scalars
            pl.BlockSpec((CONTENT_K, tn), lambda i: (0, i)),         # packed content features
            pl.BlockSpec((D, FUSED_K), lambda i: (0, 0)),            # fused weight/table
            pl.BlockSpec((D, 2), lambda i: (0, 0)),                  # uv embedding (transposed)
            pl.BlockSpec((N_BINS_LOUDNESS, 1), lambda i: (0, 0)),    # padded energy boundaries
            pl.BlockSpec((D, 1), lambda i: (0, 0)),                  # fused content bias
        ],
        out_specs=pl.BlockSpec((D, tn), lambda i: (0, i)),
        scratch_shapes=[pltpu.VMEM((FUSED_K, tn), jnp.bfloat16)],
        compiler_params=pltpu.CompilerParams(dimension_semantics=("parallel",)),
    )(scalars_t, content_t, fused["w_all"], fused["uv_emb_t"],
      fused["loud_bins"], fused["b_t"])

    return out_t.T[:n]


# ----------------------------- pure-JAX reference (f32) -------------------
def reference_forward(pitch, uv, energy, whisper, cv, spk_ids, params):
    f0_mel = 1127.0 * jnp.log1p(pitch / 700.0)
    scaled = (f0_mel - F0_MEL_MIN) * (N_BINS_MELODY - 2) / (F0_MEL_MAX - F0_MEL_MIN) + 1.0
    f0_mel = jnp.where(f0_mel > 0.0, scaled, f0_mel)
    f0_mel = jnp.where(f0_mel <= 1.0, 1.0, f0_mel)
    f0_mel = jnp.where(f0_mel > N_BINS_MELODY - 1, float(N_BINS_MELODY - 1), f0_mel)
    pitch_idx = (f0_mel + 0.5).astype(jnp.int32)
    melody_out = jnp.take(params["mel_emb"], pitch_idx, axis=0) + \
                 jnp.take(params["uv_emb"], uv.astype(jnp.int32), axis=0)
    loud_idx = jnp.searchsorted(params["loud_bins"], energy, side="left")
    loud_out = jnp.take(params["loud_emb"], loud_idx, axis=0)
    wh_out = whisper @ params["w_wh"] + params["b_wh"]
    cv_out = cv @ params["w_cv"] + params["b_cv"]
    spk_out = jnp.take(params["singer_emb"], spk_ids, axis=0)
    return melody_out + loud_out + wh_out + cv_out + spk_out


# ----------------------------- main ---------------------------------------
if __name__ == "__main__":
    key = jax.random.PRNGKey(0)
    ks = jax.random.split(key, 12)

    # ---- deterministic parameters ----
    params = {
        "mel_emb": jax.random.normal(ks[0], (N_BINS_MELODY, D), jnp.float32) * 0.1,
        "uv_emb": jax.random.normal(ks[1], (2, D), jnp.float32) * 0.1,
        "loud_bins": jnp.exp(
            jnp.linspace(np.log(LOUDNESS_MIN), np.log(LOUDNESS_MAX), N_BINS_LOUDNESS - 1)
        ).astype(jnp.float32),
        "loud_emb": jax.random.normal(ks[2], (N_BINS_LOUDNESS, D), jnp.float32) * 0.1,
        "singer_emb": jax.random.normal(ks[3], (SINGER_TABLE_SIZE, D), jnp.float32) * 0.1,
        "w_wh": jax.random.normal(ks[4], (WHISPER_DIM, D), jnp.float32) * 0.05,
        "b_wh": jax.random.normal(ks[5], (1, D), jnp.float32) * 0.05,
        "w_cv": jax.random.normal(ks[6], (CONTENTVEC_DIM, D), jnp.float32) * 0.05,
        "b_cv": jax.random.normal(ks[7], (1, D), jnp.float32) * 0.05,
    }
    fused = prepare_params(params)   # hoisted: done once, outside the forward path

    # ---- deterministic inputs (x dict of the PyTorch module) ----
    frame_pitch = jax.random.uniform(ks[8], (B, T), jnp.float32, 0.0, 600.0)
    unvoiced = jax.random.bernoulli(ks[9], 0.3, (B, T))
    frame_pitch = jnp.where(unvoiced, 0.0, frame_pitch)
    frame_uv = unvoiced.astype(jnp.float32)                       # (B, T)
    frame_energy = jax.random.uniform(ks[10], (B, T), jnp.float32, 0.0, 1.4)
    whisper_feat = jax.random.normal(ks[11], (B, T, WHISPER_DIM), jnp.float32)
    contentvec_feat = jax.random.normal(ks[0], (B, T, CONTENTVEC_DIM), jnp.float32)
    spk_id = jnp.array([[3], [7]], dtype=jnp.int32)               # (B, 1)

    # ---- flatten to row layout [B*T, ...] ----
    pitch_rows = frame_pitch.reshape(N)
    uv_rows = frame_uv.reshape(N)
    energy_rows = frame_energy.reshape(N)
    whisper_rows = whisper_feat.reshape(N, WHISPER_DIM)
    cv_rows = contentvec_feat.reshape(N, CONTENTVEC_DIM)
    spk_rows = jnp.broadcast_to(spk_id, (B, T)).reshape(N)        # int32, (N,)

    out_rows = condition_encoder(
        pitch_rows, uv_rows, energy_rows, whisper_rows, cv_rows, spk_rows, fused
    )
    out = out_rows.reshape(B, T, D)
    jax.block_until_ready(out)

    ref = reference_forward(
        pitch_rows, uv_rows, energy_rows, whisper_rows, cv_rows, spk_rows, params
    ).reshape(B, T, D)

    # bf16 MXU operands (tables/features) -> relaxed tolerance; one-hots are exact.
    np.testing.assert_allclose(np.asarray(out), np.asarray(ref), rtol=2e-2, atol=2e-2)
    print("KERNEL_OK")

    # TODO(synk): the conformer branch (use_conformer_for_content_features=True) and
    # merge_mode='concat' are not exercised; this kernel implements the 'add' merge
    # with Linear-only content encoders.
</pallas_src>

<mosaic_0001>
module attributes {stable_mosaic.version = 11 : i64} {
  func.func @condition_encoder_kernel(%arg0: i32, %arg1: memref<8x128xf32, #tpu.memory_space<vmem>>, %arg2: memref<128x128xbf16, #tpu.memory_space<vmem>>, %arg3: memref<32x640xbf16, #tpu.memory_space<vmem>>, %arg4: memref<32x2xf32, #tpu.memory_space<vmem>>, %arg5: memref<256x1xf32, #tpu.memory_space<vmem>>, %arg6: memref<32x1xf32, #tpu.memory_space<vmem>>, %arg7: memref<32x128xf32, #tpu.memory_space<vmem>>, %arg8: memref<640x128xbf16, #tpu.memory_space<vmem>>) attributes {dimension_semantics = [#tpu.dimension_semantics<parallel>], iteration_bounds = array<i64: 1>, scalar_prefetch = 0 : i64, scratch_operands = 1 : i64, tpu.core_type = #tpu.core_type<tc>, window_params = [{transform_indices = @transform_0, window_bounds = array<i64: 8, 128>}, {transform_indices = @transform_1, window_bounds = array<i64: 128, 128>}, {pipeline_mode = #tpu.pipeline_mode<synchronous>, transform_indices = @transform_2, window_bounds = array<i64: 32, 640>}, {pipeline_mode = #tpu.pipeline_mode<synchronous>, transform_indices = @transform_3, window_bounds = array<i64: 32, 2>}, {pipeline_mode = #tpu.pipeline_mode<synchronous>, transform_indices = @transform_4, window_bounds = array<i64: 256, 1>}, {pipeline_mode = #tpu.pipeline_mode<synchronous>, transform_indices = @transform_5, window_bounds = array<i64: 32, 1>}, {transform_indices = @transform_6, window_bounds = array<i64: 32, 128>}]} {
    %c0 = arith.constant 0 : index
    %c0_0 = arith.constant 0 : index
    %0 = vector.load %arg1[%c0, %c0_0] : memref<8x128xf32, #tpu.memory_space<vmem>>, vector<1x128xf32>
    %c1 = arith.constant 1 : index
    %c0_1 = arith.constant 0 : index
    %1 = vector.load %arg1[%c1, %c0_1] : memref<8x128xf32, #tpu.memory_space<vmem>>, vector<1x128xf32>
    %c2 = arith.constant 2 : index
    %c0_2 = arith.constant 0 : index
    %2 = vector.load %arg1[%c2, %c0_2] : memref<8x128xf32, #tpu.memory_space<vmem>>, vector<1x128xf32>
    %cst = arith.constant 7.000000e+02 : f32
    %3 = vector.broadcast %cst : f32 to vector<1x128xf32>
    %4 = arith.divf %0, %3 : vector<1x128xf32>
    %5 = math.log1p %4 : vector<1x128xf32>
    %cst_3 = arith.constant 1.127000e+03 : f32
    %6 = vector.broadcast %cst_3 : f32 to vector<1x128xf32>
    %7 = arith.mulf %6, %5 : vector<1x128xf32>
    %cst_4 = arith.constant 77.7549667 : f32
    %8 = vector.broadcast %cst_4 : f32 to vector<1x128xf32>
    %9 = arith.subf %7, %8 : vector<1x128xf32>
    %cst_5 = arith.constant 2.540000e+02 : f32
    %10 = vector.broadcast %cst_5 : f32 to vector<1x128xf32>
    %11 = arith.mulf %9, %10 : vector<1x128xf32>
    %cst_6 = arith.constant 986.653259 : f32
    %12 = vector.broadcast %cst_6 : f32 to vector<1x128xf32>
    %13 = arith.divf %11, %12 : vector<1x128xf32>
    %cst_7 = arith.constant 1.000000e+00 : f32
    %14 = vector.broadcast %cst_7 : f32 to vector<1x128xf32>
    %15 = arith.addf %13, %14 : vector<1x128xf32>
    %cst_8 = arith.constant 0.000000e+00 : f32
    %16 = vector.broadcast %cst_8 : f32 to vector<1x128xf32>
    %17 = arith.cmpf ogt, %7, %16 : vector<1x128xf32>
    %18 = arith.select %17, %15, %7 : vector<1x128xi1>, vector<1x128xf32>
    %cst_9 = arith.constant 1.000000e+00 : f32
    %19 = vector.broadcast %cst_9 : f32 to vector<1x128xf32>
    %20 = arith.cmpf ole, %18, %19 : vector<1x128xf32>
    %cst_10 = arith.constant 1.000000e+00 : f32
    %21 = vector.broadcast %cst_10 : f32 to vector<1x128xf32>
    %22 = arith.select %20, %21, %18 : vector<1x128xi1>, vector<1x128xf32>
    %cst_11 = arith.constant 2.550000e+02 : f32
    %23 = vector.broadcast %cst_11 : f32 to vector<1x128xf32>
    %24 = arith.cmpf ogt, %22, %23 : vector<1x128xf32>
    %cst_12 = arith.constant 2.550000e+02 : f32
    %25 = vector.broadcast %cst_12 : f32 to vector<1x128xf32>
    %26 = arith.select %24, %25, %22 : vector<1x128xi1>, vector<1x128xf32>
    %cst_13 = arith.constant 5.000000e-01 : f32
    %27 = vector.broadcast %cst_13 : f32 to vector<1x128xf32>
    %28 = arith.addf %26, %27 : vector<1x128xf32>
    %29 = arith.fptosi %28 : vector<1x128xf32> to vector<1x128xi32>
    %c0_14 = arith.constant 0 : index
    %c0_15 = arith.constant 0 : index
    %30 = vector.load %arg5[%c0_14, %c0_15] : memref<256x1xf32, #tpu.memory_space<vmem>>, vector<256x1xf32>
    %31 = vector.broadcast %2 : vector<1x128xf32> to vector<256x128xf32>
    %32 = vector.broadcast %30 : vector<256x1xf32> to vector<256x128xf32>
    %33 = arith.cmpf ogt, %31, %32 : vector<256x128xf32>
    %34 = arith.extui %33 : vector<256x128xi1> to vector<256x128xi32>
    %cst_16 = arith.constant dense<0> : vector<128xi32>
    %35 = vector.multi_reduction <add>, %34, %cst_16 [0] : vector<256x128xi32> to vector<128xi32>
    %36 = vector.shape_cast %35 : vector<128xi32> to vector<1x128xi32>
    %37 = tpu.iota {dimensions = array<i32: 0>} : vector<256x128xi32>
    %38 = vector.broadcast %29 : vector<1x128xi32> to vector<256x128xi32>
    %39 = arith.cmpi eq, %37, %38 : vector<256x128xi32>
    %40 = arith.extui %39 : vector<256x128xi1> to vector<256x128xi32>
    %41 = arith.sitofp %40 : vector<256x128xi32> to vector<256x128xf32>
    %42 = arith.truncf %41 : vector<256x128xf32> to vector<256x128xbf16>
    %c0_17 = arith.constant 0 : index
    %c0_18 = arith.constant 0 : index
    %43 = vector.load %arg8[%c0_17, %c0_18] : memref<640x128xbf16, #tpu.memory_space<vmem>>, vector<256x128xbf16>
    tpu.vector_store %arg8[%c0_17, %c0_18], %42 {strides = array<i32>} : memref<640x128xbf16, #tpu.memory_space<vmem>>, vector<256x128xbf16>,
    %44 = vector.broadcast %36 : vector<1x128xi32> to vector<256x128xi32>
    %45 = arith.cmpi eq, %37, %44 : vector<256x128xi32>
    %46 = arith.extui %45 : vector<256x128xi1> to vector<256x128xi32>
    %47 = arith.sitofp %46 : vector<256x128xi32> to vector<256x128xf32>
    %48 = arith.truncf %47 : vector<256x128xf32> to vector<256x128xbf16>
    %c256 = arith.constant 256 : index
    %c0_19 = arith.constant 0 : index
    %49 = vector.load %arg8[%c256, %c0_19] : memref<640x128xbf16, #tpu.memory_space<vmem>>, vector<256x128xbf16>
    tpu.vector_store %arg8[%c256, %c0_19], %48 {strides = array<i32>} : memref<640x128xbf16, #tpu.memory_space<vmem>>, vector<256x128xbf16>,
    %c0_20 = arith.constant 0 : index
    %c0_21 = arith.constant 0 : index
    %50 = vector.load %arg2[%c0_20, %c0_21] : memref<128x128xbf16, #tpu.memory_space<vmem>>, vector<128x128xbf16>
    %c512 = arith.constant 512 : index
    %c0_22 = arith.constant 0 : index
    %51 = vector.load %arg8[%c512, %c0_22] : memref<640x128xbf16, #tpu.memory_space<vmem>>, vector<128x128xbf16>
    tpu.vector_store %arg8[%c512, %c0_22], %50 {strides = array<i32>} : memref<640x128xbf16, #tpu.memory_space<vmem>>, vector<128x128xbf16>,
    %c0_23 = arith.constant 0 : index
    %c0_24 = arith.constant 0 : index
    %52 = vector.load %arg3[%c0_23, %c0_24] : memref<32x640xbf16, #tpu.memory_space<vmem>>, vector<32x640xbf16>
    %c0_25 = arith.constant 0 : index
    %c0_26 = arith.constant 0 : index
    %53 = vector.load %arg8[%c0_25, %c0_26] : memref<640x128xbf16, #tpu.memory_space<vmem>>, vector<640x128xbf16>
    %cst_27 = arith.constant dense<0.000000e+00> : vector<32x128xf32>
    %54 = tpu.matmul %52, %53, %cst_27 {dimension_numbers = #tpu.dot_dimension_numbers<[1], [0], [0], [1], [0, 0, 1, 1], [], []>} : vector<32x640xbf16>, vector<640x128xbf16>, vector<32x128xf32> -> vector<32x128xf32>
    %cst_28 = arith.constant 5.000000e-01 : f32
    %55 = vector.broadcast %cst_28 : f32 to vector<1x128xf32>
    %56 = arith.cmpf ogt, %1, %55 : vector<1x128xf32>
    %c0_29 = arith.constant 0 : index
    %c1_30 = arith.constant 1 : index
    %57 = vector.load %arg4[%c0_29, %c1_30] : memref<32x2xf32, #tpu.memory_space<vmem>>, vector<32x1xf32>
    %c0_31 = arith.constant 0 : index
    %c0_32 = arith.constant 0 : index
    %58 = vector.load %arg4[%c0_31, %c0_32] : memref<32x2xf32, #tpu.memory_space<vmem>>, vector<32x1xf32>
    %59 = vector.shape_cast %56 : vector<1x128xi1> to vector<1x128xi1>
    %60 = vector.broadcast %59 : vector<1x128xi1> to vector<32x128xi1>
    %61 = vector.shape_cast %57 : vector<32x1xf32> to vector<32x1xf32>
    %62 = vector.broadcast %61 : vector<32x1xf32> to vector<32x128xf32>
    %63 = vector.shape_cast %58 : vector<32x1xf32> to vector<32x1xf32>
    %64 = vector.broadcast %63 : vector<32x1xf32> to vector<32x128xf32>
    %65 = arith.select %60, %62, %64 : vector<32x128xi1>, vector<32x128xf32>
    %66 = arith.addf %54, %65 : vector<32x128xf32>
    %c0_33 = arith.constant 0 : index
    %c0_34 = arith.constant 0 : index
    %67 = vector.load %arg6[%c0_33, %c0_34] : memref<32x1xf32, #tpu.memory_space<vmem>>, vector<32x1xf32>
    %68 = vector.broadcast %67 : vector<32x1xf32> to vector<32x128xf32>
    %69 = arith.addf %66, %68 : vector<32x128xf32>
    %c0_35 = arith.constant 0 : index
    %c0_36 = arith.constant 0 : index
    %70 = vector.load %arg7[%c0_35, %c0_36] : memref<32x128xf32, #tpu.memory_space<vmem>>, vector<32x128xf32>
    tpu.vector_store %arg7[%c0_35, %c0_36], %69 {strides = array<i32>} : memref<32x128xf32, #tpu.memory_space<vmem>>, vector<32x128xf32>,
    return
  }
  func.func @transform_0(%arg0: i32) -> (i32, i32) {
    %c0_i32 = arith.constant 0 : i32
    %c0_i32_0 = arith.constant 0 : i32
    return %c0_i32, %arg0 : i32, i32
  }
  func.func @transform_1(%arg0: i32) -> (i32, i32) {
    %c0_i32 = arith.constant 0 : i32
    %c0_i32_0 = arith.constant 0 : i32
    return %c0_i32, %arg0 : i32, i32
  }
  func.func @transform_2(%arg0: i32) -> (i32, i32) {
    %c0_i32 = arith.constant 0 : i32
    %c0_i32_0 = arith.constant 0 : i32
    %c0_i32_1 = arith.constant 0 : i32
    return %c0_i32, %c0_i32_0 : i32, i32
  }
  func.func @transform_3(%arg0: i32) -> (i32, i32) {
    %c0_i32 = arith.constant 0 : i32
    %c0_i32_0 = arith.constant 0 : i32
    %c0_i32_1 = arith.constant 0 : i32
    return %c0_i32, %c0_i32_0 : i32, i32
  }
  func.func @transform_4(%arg0: i32) -> (i32, i32) {
    %c0_i32 = arith.constant 0 : i32
    %c0_i32_0 = arith.constant 0 : i32
    %c0_i32_1 = arith.constant 0 : i32
    return %c0_i32, %c0_i32_0 : i32, i32
  }
  func.func @transform_5(%arg0: i32) -> (i32, i32) {
    %c0_i32 = arith.constant 0 : i32
    %c0_i32_0 = arith.constant 0 : i32
    %c0_i32_1 = arith.constant 0 : i32
    return %c0_i32, %c0_i32_0 : i32, i32
  }
  func.func @transform_6(%arg0: i32) -> (i32, i32) {
    %c0_i32 = arith.constant 0 : i32
    %c0_i32_0 = arith.constant 0 : i32
    return %c0_i32, %arg0 : i32, i32
  }
}

</mosaic_0001>

<llo_original>
// kernel: tpu_custom_call.1
$region0: #{tpu_custom_call.1}
  #allocation0 [shape = 'u32[]', space=smem, size = 0x4, offset = 0x4, fixed_abs, tag = 'smem constant byte address 0x4 - core index']
  #allocation1 [shape = 'u32[144,128]{1,0:T(1,128)}', space=vmem, size = 0x12000, scoped, tag = 'internal scratch']
  #allocation2 [shape = 'bf16[640,128]{1,0:T(8,128)(2,1)}', space=vmem, size = 0x28000, scoped, tag = 'scratch operand']
  %s0 = inlined_call_operand.vmem [shape: f32[8,128], index: 0, kind: input, shape index: {}]
  %s1 = inlined_call_operand.vmem [shape: bf16[128,128], index: 1, kind: input, shape index: {}]
  %s2 = inlined_call_operand.vmem [shape: bf16[32,640], index: 2, kind: input, shape index: {}]
  %s3 = inlined_call_operand.vmem [shape: f32[32,2], index: 3, kind: input, shape index: {}]
  %s4 = inlined_call_operand.vmem [shape: f32[256,1], index: 4, kind: input, shape index: {}]
  %s5 = inlined_call_operand.vmem [shape: f32[32,1], index: 5, kind: input, shape index: {}]
  %s6 = inlined_call_operand.hbm [shape: f32[32,128], index: 6, kind: output, shape index: {}]
  %s7 = sld [smem:[#allocation0]]
  $region34: #{tpu_custom_call.1} parent=0
    _
  %s9 = ssub.s32 1, %s7
  %s10 = scalar_select 0, %s9, %s7
  $region1: #{tpu_custom_call.1} parent=0
    #allocation3 [shape = 'u8[16384]{0}', space=vmem, size = 0x4000, scoped, tag = 'output window, operand 0, single buffered']
    #allocation4 [shape = 's32[1]{0}', space=sflag, size = 0x4, scoped, tag = 'scoped memory for tpu_custom_call.1']
    %11 = vsyncpa [#allocation4], 0
    // Predicated region
    $region2: #{tpu_custom_call.1} parent=1 // pred_check
      _
    $region3: #{tpu_custom_call.1} parent=1 // pred_check_branch
      %13 = sbr.rel (0) target = $region5
    $region4: #{tpu_custom_call.1} parent=1 // pred_region
      _
    $region5: #{tpu_custom_call.1} parent=1 // pred_fallthru
      _
    // Predicated region
    $region6: #{tpu_custom_call.1} parent=1 // pred_check
      _
    $region7: #{tpu_custom_call.1} parent=1 // pred_check_branch
      %15 = sbr.rel (0) target = $region9
    $region8: #{tpu_custom_call.1} parent=1 // pred_region
      _
    $region9: #{tpu_custom_call.1} parent=1 // pred_fallthru
      _
    // Predicated region
    $region10: #{tpu_custom_call.1} parent=1 // pred_check
      _
    $region11: #{tpu_custom_call.1} parent=1 // pred_check_branch
      %17 = sbr.rel (0) target = $region13
    $region12: #{tpu_custom_call.1} parent=1 // pred_region
      _
    $region13: #{tpu_custom_call.1} parent=1 // pred_fallthru
      _
    // Predicated region
    $region14: #{tpu_custom_call.1} parent=1 // pred_check
      _
    $region15: #{tpu_custom_call.1} parent=1 // pred_check_branch
      %19 = sbr.rel (0) target = $region17
    $region16: #{tpu_custom_call.1} parent=1 // pred_region
      _
    $region17: #{tpu_custom_call.1} parent=1 // pred_fallthru
      _
    // Predicated region
    $region18: #{tpu_custom_call.1} parent=1 // pred_check
      _
    $region19: #{tpu_custom_call.1} parent=1 // pred_check_branch
      %21 = sbr.rel (0) target = $region21
    $region20: #{tpu_custom_call.1} parent=1 // pred_region
      _
    $region21: #{tpu_custom_call.1} parent=1 // pred_fallthru
      _
    // Predicated region
    $region22: #{tpu_custom_call.1} parent=1 // pred_check
      _
    $region23: #{tpu_custom_call.1} parent=1 // pred_check_branch
      %23 = sbr.rel (0) target = $region25
    $region24: #{tpu_custom_call.1} parent=1 // pred_region
      _
    $region25: #{tpu_custom_call.1} parent=1 // pred_fallthru
      _
    %v25 = vld [vmem:[%s0] sm:$0x1]
    %v26 = vld [vmem:[%s0 + $0x1] sm:$0x1]
    %v27 = vld [vmem:[%s0 + $0x2] sm:$0x1]
    %v28 = vrcp.pop 700.0
    %v29 = vmul.f32 %v25, %v28
    %v30 = vadd.f32 %v29, 1.0
    %v31 = vlog2.pop %v30
    %v32 = vmul.f32 %v31, 0.6931472
    %v33 = vmul.f32 -0.5, %v29
    %v34 = vadd.f32 %v33, 1.0
    %v35 = vmul.f32 %v34, %v29
    %v36 = vand.u32 2147483647, %v29
    %vm37 = vcmp.lt.f32.partialorder %v36, 0.0004427343
    %v38 = vsel %vm37, %v35, %v32
    %v39 = vmul.f32 %v38, 1127.0
    %v40 = vsub.f32 %v39, 77.75497
    %v41 = vmul.f32 %v40, 254.0
    %v42 = vrcp.pop 986.65326
    %v43 = vmul.f32 %v41, %v42
    %v44 = vadd.f32 %v43, 1.0
    %vm45 = vcmp.gt.f32.partialorder %v39, 0.0
    %v46 = vsel %vm45, %v44, %v39
    %vm47 = vcmp.le.f32.partialorder %v46, 1.0
    %v48 = vsel %vm47, 1.0, %v46
    %vm49 = vcmp.gt.f32.partialorder %v48, 255.0
    %v50 = vsel %vm49, 255.0, %v48
    %v51 = vadd.f32 %v50, 0.5
    %v52 = vcvt.f32.s32.to.zero.pseudo %v51
    %v53 = vld [vmem:[%s4] sm:$0xff]
    %v54 = vld [vmem:[%s4 + $0x8] sm:$0xff]
    %v55 = vld [vmem:[%s4 + $0x10] sm:$0xff]
    %v56 = vld [vmem:[%s4 + $0x18] sm:$0xff]
    %v57 = vld [vmem:[%s4 + $0x20] sm:$0xff]
    %v58 = vld [vmem:[%s4 + $0x28] sm:$0xff]
    %v59 = vld [vmem:[%s4 + $0x30] sm:$0xff]
    %v60 = vld [vmem:[%s4 + $0x38] sm:$0xff]
    %v61 = vld [vmem:[%s4 + $0x40] sm:$0xff]
    %v62 = vld [vmem:[%s4 + $0x48] sm:$0xff]
    %v63 = vld [vmem:[%s4 + $0x50] sm:$0xff]
    %v64 = vld [vmem:[%s4 + $0x58] sm:$0xff]
    %v65 = vld [vmem:[%s4 + $0x60] sm:$0xff]
    %v66 = vld [vmem:[%s4 + $0x68] sm:$0xff]
    %v67 = vld [vmem:[%s4 + $0x70] sm:$0xff]
    %v68 = vld [vmem:[%s4 + $0x78] sm:$0xff]
    %v69 = vld [vmem:[%s4 + $0x80] sm:$0xff]
    %v70 = vld [vmem:[%s4 + $0x88] sm:$0xff]
    %v71 = vld [vmem:[%s4 + $0x90] sm:$0xff]
    %v72 = vld [vmem:[%s4 + $0x98] sm:$0xff]
    %v73 = vld [vmem:[%s4 + $0xa0] sm:$0xff]
    %v74 = vld [vmem:[%s4 + $0xa8] sm:$0xff]
    %v75 = vld [vmem:[%s4 + $0xb0] sm:$0xff]
    %v76 = vld [vmem:[%s4 + $0xb8] sm:$0xff]
    %v77 = vld [vmem:[%s4 + $0xc0] sm:$0xff]
    %v78 = vld [vmem:[%s4 + $0xc8] sm:$0xff]
    %v79 = vld [vmem:[%s4 + $0xd0] sm:$0xff]
    %v80 = vld [vmem:[%s4 + $0xd8] sm:$0xff]
    %v81 = vld [vmem:[%s4 + $0xe0] sm:$0xff]
    %v82 = vld [vmem:[%s4 + $0xe8] sm:$0xff]
    %v83 = vld [vmem:[%s4 + $0xf0] sm:$0xff]
    %v84 = vld [vmem:[%s4 + $0xf8] sm:$0xff]
    %v85 = vlaneseq
    %v86 = vshrl.u32 %v85, 7
    %v87 = vsub.s32 0, %v86
    %v88 = vrot.slane %v27, %v87
    %90 = vset.pattern.permute.xlu0 0
    %91 = vperm.xlu0 %90, %v53
    %v92 = vpop.permute.xlu0 %91
    %95 = vset.pattern.permute.xlu0 0
    %96 = vperm.xlu0 %95, %v54
    %v97 = vpop.permute.xlu0 %96
    %100 = vset.pattern.permute.xlu0 0
    %101 = vperm.xlu0 %100, %v55
    %v102 = vpop.permute.xlu0 %101
    %105 = vset.pattern.permute.xlu0 0
    %106 = vperm.xlu0 %105, %v56
    %v107 = vpop.permute.xlu0 %106
    %110 = vset.pattern.permute.xlu0 0
    %111 = vperm.xlu0 %110, %v57
    %v112 = vpop.permute.xlu0 %111
    %115 = vset.pattern.permute.xlu0 0
    %116 = vperm.xlu0 %115, %v58
    %v117 = vpop.permute.xlu0 %116
    %120 = vset.pattern.permute.xlu0 0
    %121 = vperm.xlu0 %120, %v59
    %v122 = vpop.permute.xlu0 %121
    %125 = vset.pattern.permute.xlu0 0
    %126 = vperm.xlu0 %125, %v60
    %v127 = vpop.permute.xlu0 %126
    %130 = vset.pattern.permute.xlu0 0
    %131 = vperm.xlu0 %130, %v61
    %v132 = vpop.permute.xlu0 %131
    %135 = vset.pattern.permute.xlu0 0
    %136 = vperm.xlu0 %135, %v62
    %v137 = vpop.permute.xlu0 %136
    %140 = vset.pattern.permute.xlu0 0
    %141 = vperm.xlu0 %140, %v63
    %v142 = vpop.permute.xlu0 %141
    %145 = vset.pattern.permute.xlu0 0
    %146 = vperm.xlu0 %145, %v64
    %v147 = vpop.permute.xlu0 %146
    %150 = vset.pattern.permute.xlu0 0
    %151 = vperm.xlu0 %150, %v65
    %v152 = vpop.permute.xlu0 %151
    %155 = vset.pattern.permute.xlu0 0
    %156 = vperm.xlu0 %155, %v66
    %v157 = vpop.permute.xlu0 %156
    %160 = vset.pattern.permute.xlu0 0
    %161 = vperm.xlu0 %160, %v67
    %v162 = vpop.permute.xlu0 %161
    %165 = vset.pattern.permute.xlu0 0
    %166 = vperm.xlu0 %165, %v68
    %v167 = vpop.permute.xlu0 %166
    %170 = vset.pattern.permute.xlu0 0
    %171 = vperm.xlu0 %170, %v69
    %v172 = vpop.permute.xlu0 %171
    %175 = vset.pattern.permute.xlu0 0
    %176 = vperm.xlu0 %175, %v70
    %v177 = vpop.permute.xlu0 %176
    %180 = vset.pattern.permute.xlu0 0
    %181 = vperm.xlu0 %180, %v71
    %v182 = vpop.permute.xlu0 %181
    %185 = vset.pattern.permute.xlu0 0
    %186 = vperm.xlu0 %185, %v72
    %v187 = vpop.permute.xlu0 %186
    %190 = vset.pattern.permute.xlu0 0
    %191 = vperm.xlu0 %190, %v73
    %v192 = vpop.permute.xlu0 %191
    %195 = vset.pattern.permute.xlu0 0
    %196 = vperm.xlu0 %195, %v74
    %v197 = vpop.permute.xlu0 %196
    %200 = vset.pattern.permute.xlu0 0
    %201 = vperm.xlu0 %200, %v75
    %v202 = vpop.permute.xlu0 %201
    %205 = vset.pattern.permute.xlu0 0
    %206 = vperm.xlu0 %205, %v76
    %v207 = vpop.permute.xlu0 %206
    %210 = vset.pattern.permute.xlu0 0
    %211 = vperm.xlu0 %210, %v77
    %v212 = vpop.permute.xlu0 %211
    %215 = vset.pattern.permute.xlu0 0
    %216 = vperm.xlu0 %215, %v78
    %v217 = vpop.permute.xlu0 %216
    %220 = vset.pattern.permute.xlu0 0
    %221 = vperm.xlu0 %220, %v79
    %v222 = vpop.permute.xlu0 %221
    %225 = vset.pattern.permute.xlu0 0
    %226 = vperm.xlu0 %225, %v80
    %v227 = vpop.permute.xlu0 %226
    %230 = vset.pattern.permute.xlu0 0
    %231 = vperm.xlu0 %230, %v81
    %v232 = vpop.permute.xlu0 %231
    %235 = vset.pattern.permute.xlu0 0
    %236 = vperm.xlu0 %235, %v82
    %v237 = vpop.permute.xlu0 %236
    %240 = vset.pattern.permute.xlu0 0
    %241 = vperm.xlu0 %240, %v83
    %v242 = vpop.permute.xlu0 %241
    %245 = vset.pattern.permute.xlu0 0
    %246 = vperm.xlu0 %245, %v84
    %v247 = vpop.permute.xlu0 %246
    %vm249 = vcmp.gt.f32.partialorder %v88, %v92
    %vm250 = vcmp.gt.f32.partialorder %v88, %v97
    %vm251 = vcmp.gt.f32.partialorder %v88, %v102
    %vm252 = vcmp.gt.f32.partialorder %v88, %v107
    %vm253 = vcmp.gt.f32.partialorder %v88, %v112
    %vm254 = vcmp.gt.f32.partialorder %v88, %v117
    %vm255 = vcmp.gt.f32.partialorder %v88, %v122
    %vm256 = vcmp.gt.f32.partialorder %v88, %v127
    %vm257 = vcmp.gt.f32.partialorder %v88, %v132
    %vm258 = vcmp.gt.f32.partialorder %v88, %v137
    %vm259 = vcmp.gt.f32.partialorder %v88, %v142
    %vm260 = vcmp.gt.f32.partialorder %v88, %v147
    %vm261 = vcmp.gt.f32.partialorder %v88, %v152
    %vm262 = vcmp.gt.f32.partialorder %v88, %v157
    %vm263 = vcmp.gt.f32.partialorder %v88, %v162
    %vm264 = vcmp.gt.f32.partialorder %v88, %v167
    %vm265 = vcmp.gt.f32.partialorder %v88, %v172
    %vm266 = vcmp.gt.f32.partialorder %v88, %v177
    %vm267 = vcmp.gt.f32.partialorder %v88, %v182
    %vm268 = vcmp.gt.f32.partialorder %v88, %v187
    %vm269 = vcmp.gt.f32.partialorder %v88, %v192
    %vm270 = vcmp.gt.f32.partialorder %v88, %v197
    %vm271 = vcmp.gt.f32.partialorder %v88, %v202
    %vm272 = vcmp.gt.f32.partialorder %v88, %v207
    %vm273 = vcmp.gt.f32.partialorder %v88, %v212
    %vm274 = vcmp.gt.f32.partialorder %v88, %v217
    %vm275 = vcmp.gt.f32.partialorder %v88, %v222
    %vm276 = vcmp.gt.f32.partialorder %v88, %v227
    %vm277 = vcmp.gt.f32.partialorder %v88, %v232
    %vm278 = vcmp.gt.f32.partialorder %v88, %v237
    %vm279 = vcmp.gt.f32.partialorder %v88, %v242
    %vm280 = vcmp.gt.f32.partialorder %v88, %v247
    %v281 = vsel %vm249, 1, 0
    %v282 = vsel %vm250, 1, 0
    %v283 = vsel %vm251, 1, 0
    %v284 = vsel %vm252, 1, 0
    %v285 = vsel %vm253, 1, 0
    %v286 = vsel %vm254, 1, 0
    %v287 = vsel %vm255, 1, 0
    %v288 = vsel %vm256, 1, 0
    %v289 = vsel %vm257, 1, 0
    %v290 = vsel %vm258, 1, 0
    %v291 = vsel %vm259, 1, 0
    %v292 = vsel %vm260, 1, 0
    %v293 = vsel %vm261, 1, 0
    %v294 = vsel %vm262, 1, 0
    %v295 = vsel %vm263, 1, 0
    %v296 = vsel %vm264, 1, 0
    %v297 = vsel %vm265, 1, 0
    %v298 = vsel %vm266, 1, 0
    %v299 = vsel %vm267, 1, 0
    %v300 = vsel %vm268, 1, 0
    %v301 = vsel %vm269, 1, 0
    %v302 = vsel %vm270, 1, 0
    %v303 = vsel %vm271, 1, 0
    %v304 = vsel %vm272, 1, 0
    %v305 = vsel %vm273, 1, 0
    %v306 = vsel %vm274, 1, 0
    %v307 = vsel %vm275, 1, 0
    %v308 = vsel %vm276, 1, 0
    %v309 = vsel %vm277, 1, 0
    %v310 = vsel %vm278, 1, 0
    %v311 = vsel %vm279, 1, 0
    %v312 = vsel %vm280, 1, 0
    %v313 = vadd.s32 %v281, %v285
    %v314 = vadd.s32 %v282, %v286
    %v315 = vadd.s32 %v283, %v287
    %v316 = vadd.s32 %v284, %v288
    %v317 = vadd.s32 %v313, %v289
    %v318 = vadd.s32 %v314, %v290
    %v319 = vadd.s32 %v315, %v291
    %v320 = vadd.s32 %v316, %v292
    %v321 = vadd.s32 %v317, %v293
    %v322 = vadd.s32 %v318, %v294
    %v323 = vadd.s32 %v319, %v295
    %v324 = vadd.s32 %v320, %v296
    %v325 = vadd.s32 %v321, %v297
    %v326 = vadd.s32 %v322, %v298
    %v327 = vadd.s32 %v323, %v299
    %v328 = vadd.s32 %v324, %v300
    %v329 = vadd.s32 %v325, %v301
    %v330 = vadd.s32 %v326, %v302
    %v331 = vadd.s32 %v327, %v303
    %v332 = vadd.s32 %v328, %v304
    %v333 = vadd.s32 %v329, %v305
    %v334 = vadd.s32 %v330, %v306
    %v335 = vadd.s32 %v331, %v307
    %v336 = vadd.s32 %v332, %v308
    %v337 = vadd.s32 %v333, %v309
    %v338 = vadd.s32 %v334, %v310
    %v339 = vadd.s32 %v335, %v311
    %v340 = vadd.s32 %v336, %v312
    %v341 = vadd.s32 %v337, %v338
    %v342 = vadd.s32 %v339, %v340
    %v343 = vadd.s32 %v341, %v342
    %v344 = vrot.slane %v343, 4
    %v345 = vadd.s32 %v343, %v344
    %v346 = vrot.slane %v345, 2
    %v347 = vadd.s32 %v345, %v346
    %v348 = vrot.slane %v347, 1
    %v349 = vadd.s32 %v347, %v348
    %v350 = vlaneseq
    %v351 = vshrl.u32 %v350, 7
    %v352 = vadd.s32 %v351, 8
    %v353 = vadd.s32 %v351, 16
    %v354 = vadd.s32 %v351, 24
    %v355 = vadd.s32 %v351, 32
    %v356 = vadd.s32 %v351, 40
    %v357 = vadd.s32 %v351, 48
    %v358 = vadd.s32 %v351, 56
    %v359 = vadd.s32 %v351, 64
    %v360 = vadd.s32 %v351, 72
    %v361 = vadd.s32 %v351, 80
    %v362 = vadd.s32 %v351, 88
    %v363 = vadd.s32 %v351, 96
    %v364 = vadd.s32 %v351, 104
    %v365 = vadd.s32 %v351, 112
    %v366 = vadd.s32 %v351, 120
    %v367 = vadd.s32 %v351, 128
    %v368 = vadd.s32 %v351, 136
    %v369 = vadd.s32 %v351, 144
    %v370 = vadd.s32 %v351, 152
    %v371 = vadd.s32 %v351, 160
    %v372 = vadd.s32 %v351, 168
    %v373 = vadd.s32 %v351, 176
    %v374 = vadd.s32 %v351, 184
    %v375 = vadd.s32 %v351, 192
    %v376 = vadd.s32 %v351, 200
    %v377 = vadd.s32 %v351, 208
    %v378 = vadd.s32 %v351, 216
    %v379 = vadd.s32 %v351, 224
    %v380 = vadd.s32 %v351, 232
    %v381 = vadd.s32 %v351, 240
    %v382 = vadd.s32 %v351, 248
    %v383 = vlaneseq
    %v384 = vshrl.u32 %v383, 7
    %v385 = vsub.s32 0, %v384
    %v386 = vrot.slane %v52, %v385
    %vm387 = vcmp.eq.s32.totalorder %v351, %v386
    %vm388 = vcmp.eq.s32.totalorder %v352, %v386
    %vm389 = vcmp.eq.s32.totalorder %v353, %v386
    %vm390 = vcmp.eq.s32.totalorder %v354, %v386
    %vm391 = vcmp.eq.s32.totalorder %v355, %v386
    %vm392 = vcmp.eq.s32.totalorder %v356, %v386
    %vm393 = vcmp.eq.s32.totalorder %v357, %v386
    %vm394 = vcmp.eq.s32.totalorder %v358, %v386
    %vm395 = vcmp.eq.s32.totalorder %v359, %v386
    %vm396 = vcmp.eq.s32.totalorder %v360, %v386
    %vm397 = vcmp.eq.s32.totalorder %v361, %v386
    %vm398 = vcmp.eq.s32.totalorder %v362, %v386
    %vm399 = vcmp.eq.s32.totalorder %v363, %v386
    %vm400 = vcmp.eq.s32.totalorder %v364, %v386
    %vm401 = vcmp.eq.s32.totalorder %v365, %v386
    %vm402 = vcmp.eq.s32.totalorder %v366, %v386
    %vm403 = vcmp.eq.s32.totalorder %v367, %v386
    %vm404 = vcmp.eq.s32.totalorder %v368, %v386
    %vm405 = vcmp.eq.s32.totalorder %v369, %v386
    %vm406 = vcmp.eq.s32.totalorder %v370, %v386
    %vm407 = vcmp.eq.s32.totalorder %v371, %v386
    %vm408 = vcmp.eq.s32.totalorder %v372, %v386
    %vm409 = vcmp.eq.s32.totalorder %v373, %v386
    %vm410 = vcmp.eq.s32.totalorder %v374, %v386
    %vm411 = vcmp.eq.s32.totalorder %v375, %v386
    %vm412 = vcmp.eq.s32.totalorder %v376, %v386
    %vm413 = vcmp.eq.s32.totalorder %v377, %v386
    %vm414 = vcmp.eq.s32.totalorder %v378, %v386
    %vm415 = vcmp.eq.s32.totalorder %v379, %v386
    %vm416 = vcmp.eq.s32.totalorder %v380, %v386
    %vm417 = vcmp.eq.s32.totalorder %v381, %v386
    %vm418 = vcmp.eq.s32.totalorder %v382, %v386
    %v419 = vsel %vm387, 1, 0
    %v420 = vsel %vm388, 1, 0
    %v421 = vsel %vm389, 1, 0
    %v422 = vsel %vm390, 1, 0
    %v423 = vsel %vm391, 1, 0
    %v424 = vsel %vm392, 1, 0
    %v425 = vsel %vm393, 1, 0
    %v426 = vsel %vm394, 1, 0
    %v427 = vsel %vm395, 1, 0
    %v428 = vsel %vm396, 1, 0
    %v429 = vsel %vm397, 1, 0
    %v430 = vsel %vm398, 1, 0
    %v431 = vsel %vm399, 1, 0
    %v432 = vsel %vm400, 1, 0
    %v433 = vsel %vm401, 1, 0
    %v434 = vsel %vm402, 1, 0
    %v435 = vsel %vm403, 1, 0
    %v436 = vsel %vm404, 1, 0
    %v437 = vsel %vm405, 1, 0
    %v438 = vsel %vm406, 1, 0
    %v439 = vsel %vm407, 1, 0
    %v440 = vsel %vm408, 1, 0
    %v441 = vsel %vm409, 1, 0
    %v442 = vsel %vm410, 1, 0
    %v443 = vsel %vm411, 1, 0
    %v444 = vsel %vm412, 1, 0
    %v445 = vsel %vm413, 1, 0
    %v446 = vsel %vm414, 1, 0
    %v447 = vsel %vm415, 1, 0
    %v448 = vsel %vm416, 1, 0
    %v449 = vsel %vm417, 1, 0
    %v450 = vsel %vm418, 1, 0
    %v451 = vcvt.s32.f32 %v419
    %v452 = vcvt.s32.f32 %v420
    %v453 = vcvt.s32.f32 %v421
    %v454 = vcvt.s32.f32 %v422
    %v455 = vcvt.s32.f32 %v423
    %v456 = vcvt.s32.f32 %v424
    %v457 = vcvt.s32.f32 %v425
    %v458 = vcvt.s32.f32 %v426
    %v459 = vcvt.s32.f32 %v427
    %v460 = vcvt.s32.f32 %v428
    %v461 = vcvt.s32.f32 %v429
    %v462 = vcvt.s32.f32 %v430
    %v463 = vcvt.s32.f32 %v431
    %v464 = vcvt.s32.f32 %v432
    %v465 = vcvt.s32.f32 %v433
    %v466 = vcvt.s32.f32 %v434
    %v467 = vcvt.s32.f32 %v435
    %v468 = vcvt.s32.f32 %v436
    %v469 = vcvt.s32.f32 %v437
    %v470 = vcvt.s32.f32 %v438
    %v471 = vcvt.s32.f32 %v439
    %v472 = vcvt.s32.f32 %v440
    %v473 = vcvt.s32.f32 %v441
    %v474 = vcvt.s32.f32 %v442
    %v475 = vcvt.s32.f32 %v443
    %v476 = vcvt.s32.f32 %v444
    %v477 = vcvt.s32.f32 %v445
    %v478 = vcvt.s32.f32 %v446
    %v479 = vcvt.s32.f32 %v447
    %v480 = vcvt.s32.f32 %v448
    %v481 = vcvt.s32.f32 %v449
    %v482 = vcvt.s32.f32 %v450
    %v483 = vpack.c.bf16 %v452, %v451
    %v484 = vpack.c.bf16 %v454, %v453
    %v485 = vpack.c.bf16 %v456, %v455
    %v486 = vpack.c.bf16 %v458, %v457
    %v487 = vpack.c.bf16 %v460, %v459
    %v488 = vpack.c.bf16 %v462, %v461
    %v489 = vpack.c.bf16 %v464, %v463
    %v490 = vpack.c.bf16 %v466, %v465
    %v491 = vpack.c.bf16 %v468, %v467
    %v492 = vpack.c.bf16 %v470, %v469
    %v493 = vpack.c.bf16 %v472, %v471
    %v494 = vpack.c.bf16 %v474, %v473
    %v495 = vpack.c.bf16 %v476, %v475
    %v496 = vpack.c.bf16 %v478, %v477
    %v497 = vpack.c.bf16 %v480, %v479
    %v498 = vpack.c.bf16 %v482, %v481
    %v515 = vunpack.c.l.b16 %v483
    %v516 = vunpack.c.h.b16 %v483
    %v517 = vunpack.c.l.b16 %v484
    %v518 = vunpack.c.h.b16 %v484
    %v519 = vunpack.c.l.b16 %v485
    %v520 = vunpack.c.h.b16 %v485
    %v521 = vunpack.c.l.b16 %v486
    %v522 = vunpack.c.h.b16 %v486
    %v523 = vunpack.c.l.b16 %v487
    %v524 = vunpack.c.h.b16 %v487
    %v525 = vunpack.c.l.b16 %v488
    %v526 = vunpack.c.h.b16 %v488
    %v527 = vunpack.c.l.b16 %v489
    %v528 = vunpack.c.h.b16 %v489
    %v529 = vunpack.c.l.b16 %v490
    %v530 = vunpack.c.h.b16 %v490
    %v531 = vunpack.c.l.b16 %v491
    %v532 = vunpack.c.h.b16 %v491
    %v533 = vunpack.c.l.b16 %v492
    %v534 = vunpack.c.h.b16 %v492
    %v535 = vunpack.c.l.b16 %v493
    %v536 = vunpack.c.h.b16 %v493
    %v537 = vunpack.c.l.b16 %v494
    %v538 = vunpack.c.h.b16 %v494
    %v539 = vunpack.c.l.b16 %v495
    %v540 = vunpack.c.h.b16 %v495
    %v541 = vunpack.c.l.b16 %v496
    %v542 = vunpack.c.h.b16 %v496
    %v543 = vunpack.c.l.b16 %v497
    %v544 = vunpack.c.h.b16 %v497
    %v545 = vunpack.c.l.b16 %v498
    %v546 = vunpack.c.h.b16 %v498
    %v547 = vpack.c.b16 %v515, %v515
    %v548 = vpack.c.b16 %v516, %v516
    %v549 = vpack.c.b16 %v517, %v517
    %v550 = vpack.c.b16 %v518, %v518
    %v551 = vpack.c.b16 %v519, %v519
    %v552 = vpack.c.b16 %v520, %v520
    %v553 = vpack.c.b16 %v521, %v521
    %v554 = vpack.c.b16 %v522, %v522
    %v555 = vpack.c.b16 %v523, %v523
    %v556 = vpack.c.b16 %v524, %v524
    %v557 = vpack.c.b16 %v525, %v525
    %v558 = vpack.c.b16 %v526, %v526
    %v559 = vpack.c.b16 %v527, %v527
    %v560 = vpack.c.b16 %v528, %v528
    %v561 = vpack.c.b16 %v529, %v529
    %v562 = vpack.c.b16 %v530, %v530
    %v563 = vpack.c.b16 %v531, %v531
    %v564 = vpack.c.b16 %v532, %v532
    %v565 = vpack.c.b16 %v533, %v533
    %v566 = vpack.c.b16 %v534, %v534
    %v567 = vpack.c.b16 %v535, %v535
    %v568 = vpack.c.b16 %v536, %v536
    %v569 = vpack.c.b16 %v537, %v537
    %v570 = vpack.c.b16 %v538, %v538
    %v571 = vpack.c.b16 %v539, %v539
    %v572 = vpack.c.b16 %v540, %v540
    %v573 = vpack.c.b16 %v541, %v541
    %v574 = vpack.c.b16 %v542, %v542
    %v575 = vpack.c.b16 %v543, %v543
    %v576 = vpack.c.b16 %v544, %v544
    %v577 = vpack.c.b16 %v545, %v545
    %v578 = vpack.c.b16 %v546, %v546
    %611 = vst [vmem:[#allocation2] sm:$0xf] %v547
    %612 = vst [vmem:[#allocation2 + $0x4] sm:$0xf] %v548
    %613 = vst [vmem:[#allocation2 + $0x8] sm:$0xf] %v549
    %614 = vst [vmem:[#allocation2 + $0xc] sm:$0xf] %v550
    %615 = vst [vmem:[#allocation2 + $0x10] sm:$0xf] %v551
    %616 = vst [vmem:[#allocation2 + $0x14] sm:$0xf] %v552
    %617 = vst [vmem:[#allocation2 + $0x18] sm:$0xf] %v553
    %618 = vst [vmem:[#allocation2 + $0x1c] sm:$0xf] %v554
    %619 = vst [vmem:[#allocation2 + $0x20] sm:$0xf] %v555
    %620 = vst [vmem:[#allocation2 + $0x24] sm:$0xf] %v556
    %621 = vst [vmem:[#allocation2 + $0x28] sm:$0xf] %v557
    %622 = vst [vmem:[#allocation2 + $0x2c] sm:$0xf] %v558
    %623 = vst [vmem:[#allocation2 + $0x30] sm:$0xf] %v559
    %624 = vst [vmem:[#allocation2 + $0x34] sm:$0xf] %v560
    %625 = vst [vmem:[#allocation2 + $0x38] sm:$0xf] %v561
    %626 = vst [vmem:[#allocation2 + $0x3c] sm:$0xf] %v562
    %627 = vst [vmem:[#allocation2 + $0x40] sm:$0xf] %v563
    %628 = vst [vmem:[#allocation2 + $0x44] sm:$0xf] %v564
    %629 = vst [vmem:[#allocation2 + $0x48] sm:$0xf] %v565
    %630 = vst [vmem:[#allocation2 + $0x4c] sm:$0xf] %v566
    %631 = vst [vmem:[#allocation2 + $0x50] sm:$0xf] %v567
    %632 = vst [vmem:[#allocation2 + $0x54] sm:$0xf] %v568
    %633 = vst [vmem:[#allocation2 + $0x58] sm:$0xf] %v569
    %634 = vst [vmem:[#allocation2 + $0x5c] sm:$0xf] %v570
    %635 = vst [vmem:[#allocation2 + $0x60] sm:$0xf] %v571
    %636 = vst [vmem:[#allocation2 + $0x64] sm:$0xf] %v572
    %637 = vst [vmem:[#allocation2 + $0x68] sm:$0xf] %v573
    %638 = vst [vmem:[#allocation2 + $0x6c] sm:$0xf] %v574
    %639 = vst [vmem:[#allocation2 + $0x70] sm:$0xf] %v575
    %640 = vst [vmem:[#allocation2 + $0x74] sm:$0xf] %v576
    %641 = vst [vmem:[#allocation2 + $0x78] sm:$0xf] %v577
    %642 = vst [vmem:[#allocation2 + $0x7c] sm:$0xf] %v578
    %vm643 = vcmp.eq.s32.totalorder %v351, %v349
    %vm644 = vcmp.eq.s32.totalorder %v352, %v349
    %vm645 = vcmp.eq.s32.totalorder %v353, %v349
    %vm646 = vcmp.eq.s32.totalorder %v354, %v349
    %vm647 = vcmp.eq.s32.totalorder %v355, %v349
    %vm648 = vcmp.eq.s32.totalorder %v356, %v349
    %vm649 = vcmp.eq.s32.totalorder %v357, %v349
    %vm650 = vcmp.eq.s32.totalorder %v358, %v349
    %vm651 = vcmp.eq.s32.totalorder %v359, %v349
    %vm652 = vcmp.eq.s32.totalorder %v360, %v349
    %vm653 = vcmp.eq.s32.totalorder %v361, %v349
    %vm654 = vcmp.eq.s32.totalorder %v362, %v349
    %vm655 = vcmp.eq.s32.totalorder %v363, %v349
    %vm656 = vcmp.eq.s32.totalorder %v364, %v349
    %vm657 = vcmp.eq.s32.totalorder %v365, %v349
    %vm658 = vcmp.eq.s32.totalorder %v366, %v349
    %vm659 = vcmp.eq.s32.totalorder %v367, %v349
    %vm660 = vcmp.eq.s32.totalorder %v368, %v349
    %vm661 = vcmp.eq.s32.totalorder %v369, %v349
    %vm662 = vcmp.eq.s32.totalorder %v370, %v349
    %vm663 = vcmp.eq.s32.totalorder %v371, %v349
    %vm664 = vcmp.eq.s32.totalorder %v372, %v349
    %vm665 = vcmp.eq.s32.totalorder %v373, %v349
    %vm666 = vcmp.eq.s32.totalorder %v374, %v349
    %vm667 = vcmp.eq.s32.totalorder %v375, %v349
    %vm668 = vcmp.eq.s32.totalorder %v376, %v349
    %vm669 = vcmp.eq.s32.totalorder %v377, %v349
    %vm670 = vcmp.eq.s32.totalorder %v378, %v349
    %vm671 = vcmp.eq.s32.totalorder %v379, %v349
    %vm672 = vcmp.eq.s32.totalorder %v380, %v349
    %vm673 = vcmp.eq.s32.totalorder %v381, %v349
    %vm674 = vcmp.eq.s32.totalorder %v382, %v349
    %v675 = vsel %vm643, 1, 0
    %v676 = vsel %vm644, 1, 0
    %v677 = vsel %vm645, 1, 0
    %v678 = vsel %vm646, 1, 0
    %v679 = vsel %vm647, 1, 0
    %v680 = vsel %vm648, 1, 0
    %v681 = vsel %vm649, 1, 0
    %v682 = vsel %vm650, 1, 0
    %v683 = vsel %vm651, 1, 0
    %v684 = vsel %vm652, 1, 0
    %v685 = vsel %vm653, 1, 0
    %v686 = vsel %vm654, 1, 0
    %v687 = vsel %vm655, 1, 0
    %v688 = vsel %vm656, 1, 0
    %v689 = vsel %vm657, 1, 0
    %v690 = vsel %vm658, 1, 0
    %v691 = vsel %vm659, 1, 0
    %v692 = vsel %vm660, 1, 0
    %v693 = vsel %vm661, 1, 0
    %v694 = vsel %vm662, 1, 0
    %v695 = vsel %vm663, 1, 0
    %v696 = vsel %vm664, 1, 0
    %v697 = vsel %vm665, 1, 0
    %v698 = vsel %vm666, 1, 0
    %v699 = vsel %vm667, 1, 0
    %v700 = vsel %vm668, 1, 0
    %v701 = vsel %vm669, 1, 0
    %v702 = vsel %vm670, 1, 0
    %v703 = vsel %vm671, 1, 0
    %v704 = vsel %vm672, 1, 0
    %v705 = vsel %vm673, 1, 0
    %v706 = vsel %vm674, 1, 0
    %v707 = vcvt.s32.f32 %v675
    %v708 = vcvt.s32.f32 %v676
    %v709 = vcvt.s32.f32 %v677
    %v710 = vcvt.s32.f32 %v678
    %v711 = vcvt.s32.f32 %v679
    %v712 = vcvt.s32.f32 %v680
    %v713 = vcvt.s32.f32 %v681
    %v714 = vcvt.s32.f32 %v682
    %v715 = vcvt.s32.f32 %v683
    %v716 = vcvt.s32.f32 %v684
    %v717 = vcvt.s32.f32 %v685
    %v718 = vcvt.s32.f32 %v686
    %v719 = vcvt.s32.f32 %v687
    %v720 = vcvt.s32.f32 %v688
    %v721 = vcvt.s32.f32 %v689
    %v722 = vcvt.s32.f32 %v690
    %v723 = vcvt.s32.f32 %v691
    %v724 = vcvt.s32.f32 %v692
    %v725 = vcvt.s32.f32 %v693
    %v726 = vcvt.s32.f32 %v694
    %v727 = vcvt.s32.f32 %v695
    %v728 = vcvt.s32.f32 %v696
    %v729 = vcvt.s32.f32 %v697
    %v730 = vcvt.s32.f32 %v698
    %v731 = vcvt.s32.f32 %v699
    %v732 = vcvt.s32.f32 %v700
    %v733 = vcvt.s32.f32 %v701
    %v734 = vcvt.s32.f32 %v702
    %v735 = vcvt.s32.f32 %v703
    %v736 = vcvt.s32.f32 %v704
    %v737 = vcvt.s32.f32 %v705
    %v738 = vcvt.s32.f32 %v706
    %v739 = vpack.c.bf16 %v708, %v707
    %v740 = vpack.c.bf16 %v710, %v709
    %v741 = vpack.c.bf16 %v712, %v711
    %v742 = vpack.c.bf16 %v714, %v713
    %v743 = vpack.c.bf16 %v716, %v715
    %v744 = vpack.c.bf16 %v718, %v717
    %v745 = vpack.c.bf16 %v720, %v719
    %v746 = vpack.c.bf16 %v722, %v721
    %v747 = vpack.c.bf16 %v724, %v723
    %v748 = vpack.c.bf16 %v726, %v725
    %v749 = vpack.c.bf16 %v728, %v727
    %v750 = vpack.c.bf16 %v730, %v729
    %v751 = vpack.c.bf16 %v732, %v731
    %v752 = vpack.c.bf16 %v734, %v733
    %v753 = vpack.c.bf16 %v736, %v735
    %v754 = vpack.c.bf16 %v738, %v737
    %v771 = vunpack.c.l.b16 %v739
    %v772 = vunpack.c.h.b16 %v739
    %v773 = vunpack.c.l.b16 %v740
    %v774 = vunpack.c.h.b16 %v740
    %v775 = vunpack.c.l.b16 %v741
    %v776 = vunpack.c.h.b16 %v741
    %v777 = vunpack.c.l.b16 %v742
    %v778 = vunpack.c.h.b16 %v742
    %v779 = vunpack.c.l.b16 %v743
    %v780 = vunpack.c.h.b16 %v743
    %v781 = vunpack.c.l.b16 %v744
    %v782 = vunpack.c.h.b16 %v744
    %v783 = vunpack.c.l.b16 %v745
    %v784 = vunpack.c.h.b16 %v745
    %v785 = vunpack.c.l.b16 %v746
    %v786 = vunpack.c.h.b16 %v746
    %v787 = vunpack.c.l.b16 %v747
    %v788 = vunpack.c.h.b16 %v747
    %v789 = vunpack.c.l.b16 %v748
    %v790 = vunpack.c.h.b16 %v748
    %v791 = vunpack.c.l.b16 %v749
    %v792 = vunpack.c.h.b16 %v749
    %v793 = vunpack.c.l.b16 %v750
    %v794 = vunpack.c.h.b16 %v750
    %v795 = vunpack.c.l.b16 %v751
    %v796 = vunpack.c.h.b16 %v751
    %v797 = vunpack.c.l.b16 %v752
    %v798 = vunpack.c.h.b16 %v752
    %v799 = vunpack.c.l.b16 %v753
    %v800 = vunpack.c.h.b16 %v753
    %v801 = vunpack.c.l.b16 %v754
    %v802 = vunpack.c.h.b16 %v754
    %v803 = vpack.c.b16 %v771, %v771
    %v804 = vpack.c.b16 %v772, %v772
    %v805 = vpack.c.b16 %v773, %v773
    %v806 = vpack.c.b16 %v774, %v774
    %v807 = vpack.c.b16 %v775, %v775
    %v808 = vpack.c.b16 %v776, %v776
    %v809 = vpack.c.b16 %v777, %v777
    %v810 = vpack.c.b16 %v778, %v778
    %v811 = vpack.c.b16 %v779, %v779
    %v812 = vpack.c.b16 %v780, %v780
    %v813 = vpack.c.b16 %v781, %v781
    %v814 = vpack.c.b16 %v782, %v782
    %v815 = vpack.c.b16 %v783, %v783
    %v816 = vpack.c.b16 %v784, %v784
    %v817 = vpack.c.b16 %v785, %v785
    %v818 = vpack.c.b16 %v786, %v786
    %v819 = vpack.c.b16 %v787, %v787
    %v820 = vpack.c.b16 %v788, %v788
    %v821 = vpack.c.b16 %v789, %v789
    %v822 = vpack.c.b16 %v790, %v790
    %v823 = vpack.c.b16 %v791, %v791
    %v824 = vpack.c.b16 %v792, %v792
    %v825 = vpack.c.b16 %v793, %v793
    %v826 = vpack.c.b16 %v794, %v794
    %v827 = vpack.c.b16 %v795, %v795
    %v828 = vpack.c.b16 %v796, %v796
    %v829 = vpack.c.b16 %v797, %v797
    %v830 = vpack.c.b16 %v798, %v798
    %v831 = vpack.c.b16 %v799, %v799
    %v832 = vpack.c.b16 %v800, %v800
    %v833 = vpack.c.b16 %v801, %v801
    %v834 = vpack.c.b16 %v802, %v802
    %867 = vst [vmem:[#allocation2 + $0x80] sm:$0xf] %v803
    %868 = vst [vmem:[#allocation2 + $0x84] sm:$0xf] %v804
    %869 = vst [vmem:[#allocation2 + $0x88] sm:$0xf] %v805
    %870 = vst [vmem:[#allocation2 + $0x8c] sm:$0xf] %v806
    %871 = vst [vmem:[#allocation2 + $0x90] sm:$0xf] %v807
    %872 = vst [vmem:[#allocation2 + $0x94] sm:$0xf] %v808
    %873 = vst [vmem:[#allocation2 + $0x98] sm:$0xf] %v809
    %874 = vst [vmem:[#allocation2 + $0x9c] sm:$0xf] %v810
    %875 = vst [vmem:[#allocation2 + $0xa0] sm:$0xf] %v811
    %876 = vst [vmem:[#allocation2 + $0xa4] sm:$0xf] %v812
    %877 = vst [vmem:[#allocation2 + $0xa8] sm:$0xf] %v813
    %878 = vst [vmem:[#allocation2 + $0xac] sm:$0xf] %v814
    %879 = vst [vmem:[#allocation2 + $0xb0] sm:$0xf] %v815
    %880 = vst [vmem:[#allocation2 + $0xb4] sm:$0xf] %v816
    %881 = vst [vmem:[#allocation2 + $0xb8] sm:$0xf] %v817
    %882 = vst [vmem:[#allocation2 + $0xbc] sm:$0xf] %v818
    %883 = vst [vmem:[#allocation2 + $0xc0] sm:$0xf] %v819
    %884 = vst [vmem:[#allocation2 + $0xc4] sm:$0xf] %v820
    %885 = vst [vmem:[#allocation2 + $0xc8] sm:$0xf] %v821
    %886 = vst [vmem:[#allocation2 + $0xcc] sm:$0xf] %v822
    %887 = vst [vmem:[#allocation2 + $0xd0] sm:$0xf] %v823
    %888 = vst [vmem:[#allocation2 + $0xd4] sm:$0xf] %v824
    %889 = vst [vmem:[#allocation2 + $0xd8] sm:$0xf] %v825
    %890 = vst [vmem:[#allocation2 + $0xdc] sm:$0xf] %v826
    %891 = vst [vmem:[#allocation2 + $0xe0] sm:$0xf] %v827
    %892 = vst [vmem:[#allocation2 + $0xe4] sm:$0xf] %v828
    %893 = vst [vmem:[#allocation2 + $0xe8] sm:$0xf] %v829
    %894 = vst [vmem:[#allocation2 + $0xec] sm:$0xf] %v830
    %895 = vst [vmem:[#allocation2 + $0xf0] sm:$0xf] %v831
    %896 = vst [vmem:[#allocation2 + $0xf4] sm:$0xf] %v832
    %897 = vst [vmem:[#allocation2 + $0xf8] sm:$0xf] %v833
    %898 = vst [vmem:[#allocation2 + $0xfc] sm:$0xf] %v834
    %v899 = vld [vmem:[%s1] sm:$0xf]
    %v900 = vld [vmem:[%s1 + $0x4] sm:$0xf]
    %v901 = vld [vmem:[%s1 + $0x8] sm:$0xf]
    %v902 = vld [vmem:[%s1 + $0xc] sm:$0xf]
    %v903 = vld [vmem:[%s1 + $0x10] sm:$0xf]
    %v904 = vld [vmem:[%s1 + $0x14] sm:$0xf]
    %v905 = vld [vmem:[%s1 + $0x18] sm:$0xf]
    %v906 = vld [vmem:[%s1 + $0x1c] sm:$0xf]
    %v907 = vld [vmem:[%s1 + $0x20] sm:$0xf]
    %v908 = vld [vmem:[%s1 + $0x24] sm:$0xf]
    %v909 = vld [vmem:[%s1 + $0x28] sm:$0xf]
    %v910 = vld [vmem:[%s1 + $0x2c] sm:$0xf]
    %v911 = vld [vmem:[%s1 + $0x30] sm:$0xf]
    %v912 = vld [vmem:[%s1 + $0x34] sm:$0xf]
    %v913 = vld [vmem:[%s1 + $0x38] sm:$0xf]
    %v914 = vld [vmem:[%s1 + $0x3c] sm:$0xf]
    %915 = vst [vmem:[#allocation2 + $0x100] sm:$0xf] %v899
    %916 = vst [vmem:[#allocation2 + $0x104] sm:$0xf] %v900
    %917 = vst [vmem:[#allocation2 + $0x108] sm:$0xf] %v901
    %918 = vst [vmem:[#allocation2 + $0x10c] sm:$0xf] %v902
    %919 = vst [vmem:[#allocation2 + $0x110] sm:$0xf] %v903
    %920 = vst [vmem:[#allocation2 + $0x114] sm:$0xf] %v904
    %921 = vst [vmem:[#allocation2 + $0x118] sm:$0xf] %v905
    %922 = vst [vmem:[#allocation2 + $0x11c] sm:$0xf] %v906
    %923 = vst [vmem:[#allocation2 + $0x120] sm:$0xf] %v907
    %924 = vst [vmem:[#allocation2 + $0x124] sm:$0xf] %v908
    %925 = vst [vmem:[#allocation2 + $0x128] sm:$0xf] %v909
    %926 = vst [vmem:[#allocation2 + $0x12c] sm:$0xf] %v910
    %927 = vst [vmem:[#allocation2 + $0x130] sm:$0xf] %v911
    %928 = vst [vmem:[#allocation2 + $0x134] sm:$0xf] %v912
    %929 = vst [vmem:[#allocation2 + $0x138] sm:$0xf] %v913
    %930 = vst [vmem:[#allocation2 + $0x13c] sm:$0xf] %v914
    %v931 = vld [vmem:[%s2] sm:$0xff]
    %v932 = vld [vmem:[%s2 + $0x8] sm:$0xff]
    %v933 = vld [vmem:[%s2 + $0x10] sm:$0xf]
    %v934 = vld [vmem:[%s2 + $0x14] sm:$0xff]
    %v935 = vld [vmem:[%s2 + $0x1c] sm:$0xff]
    %v936 = vld [vmem:[%s2 + $0x24] sm:$0xf]
    %v937 = vld [vmem:[%s2 + $0x28] sm:$0xff]
    %v938 = vld [vmem:[%s2 + $0x30] sm:$0xff]
    %v939 = vld [vmem:[%s2 + $0x38] sm:$0xf]
    %v940 = vld [vmem:[%s2 + $0x3c] sm:$0xff]
    %v941 = vld [vmem:[%s2 + $0x44] sm:$0xff]
    %v942 = vld [vmem:[%s2 + $0x4c] sm:$0xf]
    %v943 = vld [vmem:[#allocation2] sm:$0xf]
    %v944 = vld [vmem:[#allocation2 + $0x4] sm:$0xf]
    %v945 = vld [vmem:[#allocation2 + $0x8] sm:$0xf]
    %v946 = vld [vmem:[#allocation2 + $0xc] sm:$0xf]
    %v947 = vld [vmem:[#allocation2 + $0x10] sm:$0xf]
    %v948 = vld [vmem:[#allocation2 + $0x14] sm:$0xf]
    %v949 = vld [vmem:[#allocation2 + $0x18] sm:$0xf]
    %v950 = vld [vmem:[#allocation2 + $0x1c] sm:$0xf]
    %v951 = vld [vmem:[#allocation2 + $0x20] sm:$0xf]
    %v952 = vld [vmem:[#allocation2 + $0x24] sm:$0xf]
    %v953 = vld [vmem:[#allocation2 + $0x28] sm:$0xf]
    %v954 = vld [vmem:[#allocation2 + $0x2c] sm:$0xf]
    %v955 = vld [vmem:[#allocation2 + $0x30] sm:$0xf]
    %v956 = vld [vmem:[#allocation2 + $0x34] sm:$0xf]
    %v957 = vld [vmem:[#allocation2 + $0x38] sm:$0xf]
    %v958 = vld [vmem:[#allocation2 + $0x3c] sm:$0xf]
    %v959 = vld [vmem:[#allocation2 + $0x40] sm:$0xf]
    %v960 = vld [vmem:[#allocation2 + $0x44] sm:$0xf]
    %v961 = vld [vmem:[#allocation2 + $0x48] sm:$0xf]
    %v962 = vld [vmem:[#allocation2 + $0x4c] sm:$0xf]
    %v963 = vld [vmem:[#allocation2 + $0x50] sm:$0xf]
    %v964 = vld [vmem:[#allocation2 + $0x54] sm:$0xf]
    %v965 = vld [vmem:[#allocation2 + $0x58] sm:$0xf]
    %v966 = vld [vmem:[#allocation2 + $0x5c] sm:$0xf]
    %v967 = vld [vmem:[#allocation2 + $0x60] sm:$0xf]
    %v968 = vld [vmem:[#allocation2 + $0x64] sm:$0xf]
    %v969 = vld [vmem:[#allocation2 + $0x68] sm:$0xf]
    %v970 = vld [vmem:[#allocation2 + $0x6c] sm:$0xf]
    %v971 = vld [vmem:[#allocation2 + $0x70] sm:$0xf]
    %v972 = vld [vmem:[#allocation2 + $0x74] sm:$0xf]
    %v973 = vld [vmem:[#allocation2 + $0x78] sm:$0xf]
    %v974 = vld [vmem:[#allocation2 + $0x7c] sm:$0xf]
    %v975 = vld [vmem:[#allocation2 + $0x80] sm:$0xf]
    %v976 = vld [vmem:[#allocation2 + $0x84] sm:$0xf]
    %v977 = vld [vmem:[#allocation2 + $0x88] sm:$0xf]
    %v978 = vld [vmem:[#allocation2 + $0x8c] sm:$0xf]
    %v979 = vld [vmem:[#allocation2 + $0x90] sm:$0xf]
    %v980 = vld [vmem:[#allocation2 + $0x94] sm:$0xf]
    %v981 = vld [vmem:[#allocation2 + $0x98] sm:$0xf]
    %v982 = vld [vmem:[#allocation2 + $0x9c] sm:$0xf]
    %v983 = vld [vmem:[#allocation2 + $0xa0] sm:$0xf]
    %v984 = vld [vmem:[#allocation2 + $0xa4] sm:$0xf]
    %v985 = vld [vmem:[#allocation2 + $0xa8] sm:$0xf]
    %v986 = vld [vmem:[#allocation2 + $0xac] sm:$0xf]
    %v987 = vld [vmem:[#allocation2 + $0xb0] sm:$0xf]
    %v988 = vld [vmem:[#allocation2 + $0xb4] sm:$0xf]
    %v989 = vld [vmem:[#allocation2 + $0xb8] sm:$0xf]
    %v990 = vld [vmem:[#allocation2 + $0xbc] sm:$0xf]
    %v991 = vld [vmem:[#allocation2 + $0xc0] sm:$0xf]
    %v992 = vld [vmem:[#allocation2 + $0xc4] sm:$0xf]
    %v993 = vld [vmem:[#allocation2 + $0xc8] sm:$0xf]
    %v994 = vld [vmem:[#allocation2 + $0xcc] sm:$0xf]
    %v995 = vld [vmem:[#allocation2 + $0xd0] sm:$0xf]
    %v996 = vld [vmem:[#allocation2 + $0xd4] sm:$0xf]
    %v997 = vld [vmem:[#allocation2 + $0xd8] sm:$0xf]
    %v998 = vld [vmem:[#allocation2 + $0xdc] sm:$0xf]
    %v999 = vld [vmem:[#allocation2 + $0xe0] sm:$0xf]
    %v1000 = vld [vmem:[#allocation2 + $0xe4] sm:$0xf]
    %v1001 = vld [vmem:[#allocation2 + $0xe8] sm:$0xf]
    %v1002 = vld [vmem:[#allocation2 + $0xec] sm:$0xf]
    %v1003 = vld [vmem:[#allocation2 + $0xf0] sm:$0xf]
    %v1004 = vld [vmem:[#allocation2 + $0xf4] sm:$0xf]
    %v1005 = vld [vmem:[#allocation2 + $0xf8] sm:$0xf]
    %v1006 = vld [vmem:[#allocation2 + $0xfc] sm:$0xf]
    %v1007 = vld [vmem:[#allocation2 + $0x100] sm:$0xf]
    %v1008 = vld [vmem:[#allocation2 + $0x104] sm:$0xf]
    %v1009 = vld [vmem:[#allocation2 + $0x108] sm:$0xf]
    %v1010 = vld [vmem:[#allocation2 + $0x10c] sm:$0xf]
    %v1011 = vld [vmem:[#allocation2 + $0x110] sm:$0xf]
    %v1012 = vld [vmem:[#allocation2 + $0x114] sm:$0xf]
    %v1013 = vld [vmem:[#allocation2 + $0x118] sm:$0xf]
    %v1014 = vld [vmem:[#allocation2 + $0x11c] sm:$0xf]
    %v1015 = vld [vmem:[#allocation2 + $0x120] sm:$0xf]
    %v1016 = vld [vmem:[#allocation2 + $0x124] sm:$0xf]
    %v1017 = vld [vmem:[#allocation2 + $0x128] sm:$0xf]
    %v1018 = vld [vmem:[#allocation2 + $0x12c] sm:$0xf]
    %v1019 = vld [vmem:[#allocation2 + $0x130] sm:$0xf]
    %v1020 = vld [vmem:[#allocation2 + $0x134] sm:$0xf]
    %v1021 = vld [vmem:[#allocation2 + $0x138] sm:$0xf]
    %v1022 = vld [vmem:[#allocation2 + $0x13c] sm:$0xf]
    %vm1023 = vcmp.gt.f32.partialorder %v26, 0.5
    %v1024 = vld [vmem:[%s3] sm:$0xff]
    %v1025 = vld [vmem:[%s3 + $0x8] sm:$0xff]
    %v1026 = vld [vmem:[%s3 + $0x10] sm:$0xff]
    %v1027 = vld [vmem:[%s3 + $0x18] sm:$0xff]
    %v1028 = vsel %vm1023, 1, 0
    %v1029 = vlaneseq
    %v1030 = vshrl.u32 %v1029, 7
    %v1031 = vsub.s32 0, %v1030
    %v1032 = vrot.slane %v1028, %v1031
    %vm1033 = vcmp.eq.s32.totalorder %v1032, 1
    %1035 = vset.pattern.permute.xlu0 1
    %1036 = vperm.xlu0 %1035, %v1024
    %v1037 = vpop.permute.xlu0 %1036
    %1040 = vset.pattern.permute.xlu0 1
    %1041 = vperm.xlu0 %1040, %v1025
    %v1042 = vpop.permute.xlu0 %1041
    %1045 = vset.pattern.permute.xlu0 1
    %1046 = vperm.xlu0 %1045, %v1026
    %v1047 = vpop.permute.xlu0 %1046
    %1050 = vset.pattern.permute.xlu0 1
    %1051 = vperm.xlu0 %1050, %v1027
    %v1052 = vpop.permute.xlu0 %1051
    %1054 = vset.pattern.permute.xlu0 0
    %1055 = vperm.xlu0 %1054, %v1024
    %v1056 = vpop.permute.xlu0 %1055
    %1058 = vset.pattern.permute.xlu0 0
    %1059 = vperm.xlu0 %1058, %v1025
    %v1060 = vpop.permute.xlu0 %1059
    %1062 = vset.pattern.permute.xlu0 0
    %1063 = vperm.xlu0 %1062, %v1026
    %v1064 = vpop.permute.xlu0 %1063
    %1066 = vset.pattern.permute.xlu0 0
    %1067 = vperm.xlu0 %1066, %v1027
    %v1068 = vpop.permute.xlu0 %1067
    %v1070 = vsel %vm1033, %v1037, %v1056
    %v1071 = vsel %vm1033, %v1042, %v1060
    %v1072 = vsel %vm1033, %v1047, %v1064
    %v1073 = vsel %vm1033, %v1052, %v1068
    %v1086 = vunpack.c.l.b16 %v931
    %v1087 = vunpack.c.h.b16 %v931
    %v1088 = vunpack.c.l.b16 %v932
    %v1089 = vunpack.c.h.b16 %v932
    %v1090 = vunpack.c.l.b16 %v933
    %v1091 = vunpack.c.l.b16 %v934
    %v1092 = vunpack.c.h.b16 %v934
    %v1093 = vunpack.c.l.b16 %v935
    %v1094 = vunpack.c.h.b16 %v935
    %v1095 = vunpack.c.l.b16 %v936
    %v1096 = vunpack.c.l.b16 %v937
    %v1097 = vunpack.c.h.b16 %v937
    %v1098 = vunpack.c.l.b16 %v938
    %v1099 = vunpack.c.h.b16 %v938
    %v1100 = vunpack.c.l.b16 %v939
    %v1101 = vunpack.c.l.b16 %v940
    %v1102 = vunpack.c.h.b16 %v940
    %v1103 = vunpack.c.l.b16 %v941
    %v1104 = vunpack.c.h.b16 %v941
    %v1105 = vunpack.c.l.b16 %v942
    %v1106 = vpack.c.b16 %v1091, %v1086
    %v1107 = vpack.c.b16 %v1092, %v1087
    %v1108 = vpack.c.b16 %v1093, %v1088
    %v1109 = vpack.c.b16 %v1094, %v1089
    %v1110 = vpack.c.b16 %v1095, %v1090
    %v1111 = vpack.c.b16 %v1101, %v1096
    %v1112 = vpack.c.b16 %v1102, %v1097
    %v1113 = vpack.c.b16 %v1103, %v1098
    %v1114 = vpack.c.b16 %v1104, %v1099
    %v1115 = vpack.c.b16 %v1105, %v1100
    %v1206 = vunpack.c.l.b16 %v943
    %v1207 = vunpack.c.l.b16 %v944
    %v1208 = vunpack.c.l.b16 %v945
    %v1209 = vunpack.c.l.b16 %v946
    %v1210 = vunpack.c.l.b16 %v947
    %v1211 = vunpack.c.l.b16 %v948
    %v1212 = vunpack.c.l.b16 %v949
    %v1213 = vunpack.c.l.b16 %v950
    %v1214 = vunpack.c.l.b16 %v951
    %v1215 = vunpack.c.l.b16 %v952
    %v1216 = vunpack.c.l.b16 %v953
    %v1217 = vunpack.c.l.b16 %v954
    %v1218 = vunpack.c.l.b16 %v955
    %v1219 = vunpack.c.l.b16 %v956
    %v1220 = vunpack.c.l.b16 %v957
    %v1221 = vunpack.c.l.b16 %v958
    %v1222 = vunpack.c.l.b16 %v959
    %v1223 = vunpack.c.l.b16 %v960
    %v1224 = vunpack.c.l.b16 %v961
    %v1225 = vunpack.c.l.b16 %v962
    %v1226 = vunpack.c.l.b16 %v963
    %v1227 = vunpack.c.l.b16 %v964
    %v1228 = vunpack.c.l.b16 %v965
    %v1229 = vunpack.c.l.b16 %v966
    %v1230 = vunpack.c.l.b16 %v967
    %v1231 = vunpack.c.l.b16 %v968
    %v1232 = vunpack.c.l.b16 %v969
    %v1233 = vunpack.c.l.b16 %v970
    %v1234 = vunpack.c.l.b16 %v971
    %v1235 = vunpack.c.l.b16 %v972
    %v1236 = vunpack.c.l.b16 %v973
    %v1237 = vunpack.c.l.b16 %v974
    %v1238 = vunpack.c.l.b16 %v975
    %v1239 = vunpack.c.l.b16 %v976
    %v1240 = vunpack.c.l.b16 %v977
    %v1241 = vunpack.c.l.b16 %v978
    %v1242 = vunpack.c.l.b16 %v979
    %v1243 = vunpack.c.l.b16 %v980
    %v1244 = vunpack.c.l.b16 %v981
    %v1245 = vunpack.c.l.b16 %v982
    %v1246 = vunpack.c.l.b16 %v983
    %v1247 = vunpack.c.l.b16 %v984
    %v1248 = vunpack.c.l.b16 %v985
    %v1249 = vunpack.c.l.b16 %v986
    %v1250 = vunpack.c.l.b16 %v987
    %v1251 = vunpack.c.l.b16 %v988
    %v1252 = vunpack.c.l.b16 %v989
    %v1253 = vunpack.c.l.b16 %v990
    %v1254 = vunpack.c.l.b16 %v991
    %v1255 = vunpack.c.l.b16 %v992
    %v1256 = vunpack.c.l.b16 %v993
    %v1257 = vunpack.c.l.b16 %v994
    %v1258 = vunpack.c.l.b16 %v995
    %v1259 = vunpack.c.l.b16 %v996
    %v1260 = vunpack.c.l.b16 %v997
    %v1261 = vunpack.c.l.b16 %v998
    %v1262 = vunpack.c.l.b16 %v999
    %v1263 = vunpack.c.l.b16 %v1000
    %v1264 = vunpack.c.l.b16 %v1001
    %v1265 = vunpack.c.l.b16 %v1002
    %v1266 = vunpack.c.l.b16 %v1003
    %v1267 = vunpack.c.l.b16 %v1004
    %v1268 = vunpack.c.l.b16 %v1005
    %v1269 = vunpack.c.l.b16 %v1006
    %v1270 = vunpack.c.l.b16 %v1007
    %v1271 = vunpack.c.l.b16 %v1008
    %v1272 = vunpack.c.l.b16 %v1009
    %v1273 = vunpack.c.l.b16 %v1010
    %v1274 = vunpack.c.l.b16 %v1011
    %v1275 = vunpack.c.l.b16 %v1012
    %v1276 = vunpack.c.l.b16 %v1013
    %v1277 = vunpack.c.l.b16 %v1014
    %v1278 = vunpack.c.l.b16 %v1015
    %v1279 = vunpack.c.l.b16 %v1016
    %v1280 = vunpack.c.l.b16 %v1017
    %v1281 = vunpack.c.l.b16 %v1018
    %v1282 = vunpack.c.l.b16 %v1019
    %v1283 = vunpack.c.l.b16 %v1020
    %v1284 = vunpack.c.l.b16 %v1021
    %v1285 = vunpack.c.l.b16 %v1022
    %v1286 = vpack.c.b16 %v1207, %v1206
    %v1287 = vpack.c.b16 %v1209, %v1208
    %v1288 = vpack.c.b16 %v1211, %v1210
    %v1289 = vpack.c.b16 %v1213, %v1212
    %v1290 = vpack.c.b16 %v1215, %v1214
    %v1291 = vpack.c.b16 %v1217, %v1216
    %v1292 = vpack.c.b16 %v1219, %v1218
    %v1293 = vpack.c.b16 %v1221, %v1220
    %v1294 = vpack.c.b16 %v1223, %v1222
    %v1295 = vpack.c.b16 %v1225, %v1224
    %v1296 = vpack.c.b16 %v1227, %v1226
    %v1297 = vpack.c.b16 %v1229, %v1228
    %v1298 = vpack.c.b16 %v1231, %v1230
    %v1299 = vpack.c.b16 %v1233, %v1232
    %v1300 = vpack.c.b16 %v1235, %v1234
    %v1301 = vpack.c.b16 %v1237, %v1236
    %v1302 = vpack.c.b16 %v1239, %v1238
    %v1303 = vpack.c.b16 %v1241, %v1240
    %v1304 = vpack.c.b16 %v1243, %v1242
    %v1305 = vpack.c.b16 %v1245, %v1244
    %v1306 = vpack.c.b16 %v1247, %v1246
    %v1307 = vpack.c.b16 %v1249, %v1248
    %v1308 = vpack.c.b16 %v1251, %v1250
    %v1309 = vpack.c.b16 %v1253, %v1252
    %v1310 = vpack.c.b16 %v1255, %v1254
    %v1311 = vpack.c.b16 %v1257, %v1256
    %v1312 = vpack.c.b16 %v1259, %v1258
    %v1313 = vpack.c.b16 %v1261, %v1260
    %v1314 = vpack.c.b16 %v1263, %v1262
    %v1315 = vpack.c.b16 %v1265, %v1264
    %v1316 = vpack.c.b16 %v1267, %v1266
    %v1317 = vpack.c.b16 %v1269, %v1268
    %v1318 = vpack.c.b16 %v1271, %v1270
    %v1319 = vpack.c.b16 %v1273, %v1272
    %v1320 = vpack.c.b16 %v1275, %v1274
    %v1321 = vpack.c.b16 %v1277, %v1276
    %v1322 = vpack.c.b16 %v1279, %v1278
    %v1323 = vpack.c.b16 %v1281, %v1280
    %v1324 = vpack.c.b16 %v1283, %v1282
    %v1325 = vpack.c.b16 %v1285, %v1284
    %1366 = vmatprep.subr.bf16.mxu0 0
    %1367 = vmatpush1.bf16.msra.mxu0 %v1293
    %1368 = vmatprep.subr.bf16.mxu0 0
    %1369 = vmatpush1.bf16.msra.mxu0 %v1292
    %1370 = vmatprep.subr.bf16.mxu0 0
    %1371 = vmatpush1.bf16.msra.mxu0 %v1291
    %1372 = vmatprep.subr.bf16.mxu0 0
    %1373 = vmatpush1.bf16.msra.mxu0 %v1290
    %1374 = vmatprep.subr.bf16.mxu0 0
    %1375 = vmatpush1.bf16.msra.mxu0 %v1289
    %1376 = vmatprep.subr.bf16.mxu0 0
    %1377 = vmatpush1.bf16.msra.mxu0 %v1288
    %1378 = vmatprep.subr.bf16.mxu0 0
    %1379 = vmatpush1.bf16.msra.mxu0 %v1287
    %1380 = vmatprep.subr.bf16.mxu0 0
    %1381 = vmatpush1.bf16.msra.mxu0 %v1286
    %1382 = vmatprep.subr.bf16.mxu0 0
    %1383 = vmatpush2.bf16.msra.mxu0 %v1301
    %1384 = vmatprep.subr.bf16.mxu0 0
    %1385 = vmatpush2.bf16.msra.mxu0 %v1300
    %1386 = vmatprep.subr.bf16.mxu0 0
    %1387 = vmatpush2.bf16.msra.mxu0 %v1299
    %1388 = vmatprep.subr.bf16.mxu0 0
    %1389 = vmatpush2.bf16.msra.mxu0 %v1298
    %1390 = vmatprep.subr.bf16.mxu0 0
    %1391 = vmatpush2.bf16.msra.mxu0 %v1297
    %1392 = vmatprep.subr.bf16.mxu0 0
    %1393 = vmatpush2.bf16.msra.mxu0 %v1296
    %1394 = vmatprep.subr.bf16.mxu0 0
    %1395 = vmatpush2.bf16.msra.mxu0 %v1295
    %1396 = vmatprep.subr.bf16.mxu0 0
    %1397 = vmatpush2.bf16.msra.mxu0 %v1294
    %1398 = vmatprep.mubr.bf16.mxu0 %v1107
    %1399 = vmatmul.mubr.bf16.gmra.mxu0 %v1106
    %v1400 = vpop.f32.mrf.mxu0
    %v1401 = vadd.f32 %v1070, %v1400
    %v1402 = vpop.f32.mrf.mxu0
    %v1403 = vpop.f32.mrf.mxu0
    %v1404 = vadd.f32 %v1071, %v1403
    %v1405 = vpop.f32.mrf.mxu0
    %1406 = vmatprep.mubr.bf16.mxu0 %v1112
    %1407 = vmatmul.mubr.bf16.gmra.mxu0 %v1111
    %v1408 = vpop.f32.mrf.mxu0
    %v1409 = vadd.f32 %v1072, %v1408
    %v1410 = vpop.f32.mrf.mxu0
    %v1411 = vpop.f32.mrf.mxu0
    %v1412 = vadd.f32 %v1073, %v1411
    %v1413 = vpop.f32.mrf.mxu0
    %1414 = vdwg.mxu0
    %1415 = vmatprep.subr.bf16.mxu0 0
    %1416 = vmatpush1.bf16.msra.mxu0 %v1309
    %1417 = vmatprep.subr.bf16.mxu0 0
    %1418 = vmatpush1.bf16.msra.mxu0 %v1308
    %1419 = vmatprep.subr.bf16.mxu0 0
    %1420 = vmatpush1.bf16.msra.mxu0 %v1307
    %1421 = vmatprep.subr.bf16.mxu0 0
    %1422 = vmatpush1.bf16.msra.mxu0 %v1306
    %1423 = vmatprep.subr.bf16.mxu0 0
    %1424 = vmatpush1.bf16.msra.mxu0 %v1305
    %1425 = vmatprep.subr.bf16.mxu0 0
    %1426 = vmatpush1.bf16.msra.mxu0 %v1304
    %1427 = vmatprep.subr.bf16.mxu0 0
    %1428 = vmatpush1.bf16.msra.mxu0 %v1303
    %1429 = vmatprep.subr.bf16.mxu0 0
    %1430 = vmatpush1.bf16.msra.mxu0 %v1302
    %1431 = vmatprep.subr.bf16.mxu0 0
    %1432 = vmatpush2.bf16.msra.mxu0 %v1317
    %1433 = vmatprep.subr.bf16.mxu0 0
    %1434 = vmatpush2.bf16.msra.mxu0 %v1316
    %1435 = vmatprep.subr.bf16.mxu0 0
    %1436 = vmatpush2.bf16.msra.mxu0 %v1315
    %1437 = vmatprep.subr.bf16.mxu0 0
    %1438 = vmatpush2.bf16.msra.mxu0 %v1314
    %1439 = vmatprep.subr.bf16.mxu0 0
    %1440 = vmatpush2.bf16.msra.mxu0 %v1313
    %1441 = vmatprep.subr.bf16.mxu0 0
    %1442 = vmatpush2.bf16.msra.mxu0 %v1312
    %1443 = vmatprep.subr.bf16.mxu0 0
    %1444 = vmatpush2.bf16.msra.mxu0 %v1311
    %1445 = vmatprep.subr.bf16.mxu0 0
    %1446 = vmatpush2.bf16.msra.mxu0 %v1310
    %1447 = vmatprep.mubr.bf16.mxu0 %v1109
    %1448 = vmatmul.mubr.bf16.gmra.mxu0 %v1108
    %v1449 = vpop.f32.mrf.mxu0
    %v1450 = vadd.f32 %v1401, %v1449
    %v1451 = vpop.f32.mrf.mxu0
    %v1452 = vpop.f32.mrf.mxu0
    %v1453 = vadd.f32 %v1404, %v1452
    %v1454 = vpop.f32.mrf.mxu0
    %1455 = vmatprep.mubr.bf16.mxu0 %v1114
    %1456 = vmatmul.mubr.bf16.gmra.mxu0 %v1113
    %v1457 = vpop.f32.mrf.mxu0
    %v1458 = vadd.f32 %v1409, %v1457
    %v1459 = vpop.f32.mrf.mxu0
    %v1460 = vpop.f32.mrf.mxu0
    %v1461 = vadd.f32 %v1412, %v1460
    %v1462 = vpop.f32.mrf.mxu0
    %1463 = vdwg.mxu0
    %1464 = vmatprep.subr.bf16.mxu0 0
    %1465 = vmatpush1.bf16.msra.mxu0 %v1325
    %1466 = vmatprep.subr.bf16.mxu0 0
    %1467 = vmatpush1.bf16.msra.mxu0 %v1324
    %1468 = vmatprep.subr.bf16.mxu0 0
    %1469 = vmatpush1.bf16.msra.mxu0 %v1323
    %1470 = vmatprep.subr.bf16.mxu0 0
    %1471 = vmatpush1.bf16.msra.mxu0 %v1322
    %1472 = vmatprep.subr.bf16.mxu0 0
    %1473 = vmatpush1.bf16.msra.mxu0 %v1321
    %1474 = vmatprep.subr.bf16.mxu0 0
    %1475 = vmatpush1.bf16.msra.mxu0 %v1320
    %1476 = vmatprep.subr.bf16.mxu0 0
    %1477 = vmatpush1.bf16.msra.mxu0 %v1319
    %1478 = vmatprep.subr.bf16.mxu0 0
    %1479 = vmatpush1.bf16.msra.mxu0 %v1318
    %1480 = vmatprep.subr.bf16.mxu0 0
    %1481 = vmatpush2.bf16.msra.mxu0 0
    %1482 = vmatprep.subr.bf16.mxu0 0
    %1483 = vmatpush2.bf16.msra.mxu0 0
    %1484 = vmatprep.subr.bf16.mxu0 0
    %1485 = vmatpush2.bf16.msra.mxu0 0
    %1486 = vmatprep.subr.bf16.mxu0 0
    %1487 = vmatpush2.bf16.msra.mxu0 0
    %1488 = vmatprep.subr.bf16.mxu0 0
    %1489 = vmatpush2.bf16.msra.mxu0 0
    %1490 = vmatprep.subr.bf16.mxu0 0
    %1491 = vmatpush2.bf16.msra.mxu0 0
    %1492 = vmatprep.subr.bf16.mxu0 0
    %1493 = vmatpush2.bf16.msra.mxu0 0
    %1494 = vmatprep.subr.bf16.mxu0 0
    %1495 = vmatpush2.bf16.msra.mxu0 0
    %1496 = vmatprep.mubr.bf16.mxu0 0
    %1497 = vmatmul.mubr.bf16.gmra.mxu0 %v1110
    %v1498 = vpop.f32.mrf.mxu0
    %v1499 = vadd.f32 %v1450, %v1498
    %v1500 = vpop.f32.mrf.mxu0
    %v1501 = vpop.f32.mrf.mxu0
    %v1502 = vadd.f32 %v1453, %v1501
    %v1503 = vpop.f32.mrf.mxu0
    %1504 = vmatprep.mubr.bf16.mxu0 0
    %1505 = vmatmul.mubr.bf16.gmra.mxu0 %v1115
    %v1506 = vpop.f32.mrf.mxu0
    %v1507 = vadd.f32 %v1458, %v1506
    %v1508 = vpop.f32.mrf.mxu0
    %v1509 = vpop.f32.mrf.mxu0
    %v1510 = vadd.f32 %v1461, %v1509
    %v1511 = vpop.f32.mrf.mxu0
    %1512 = vdwg.mxu0
    %v1513 = vld [vmem:[%s5] sm:$0xff]
    %v1514 = vld [vmem:[%s5 + $0x8] sm:$0xff]
    %v1515 = vld [vmem:[%s5 + $0x10] sm:$0xff]
    %v1516 = vld [vmem:[%s5 + $0x18] sm:$0xff]
    %1518 = vset.pattern.permute.xlu0 0
    %1519 = vperm.xlu0 %1518, %v1513
    %v1520 = vpop.permute.xlu0 %1519
    %1523 = vset.pattern.permute.xlu0 0
    %1524 = vperm.xlu0 %1523, %v1514
    %v1525 = vpop.permute.xlu0 %1524
    %1528 = vset.pattern.permute.xlu0 0
    %1529 = vperm.xlu0 %1528, %v1515
    %v1530 = vpop.permute.xlu0 %1529
    %1533 = vset.pattern.permute.xlu0 0
    %1534 = vperm.xlu0 %1533, %v1516
    %v1535 = vpop.permute.xlu0 %1534
    %v1537 = vadd.f32 %v1499, %v1520
    %v1538 = vadd.f32 %v1502, %v1525
    %v1539 = vadd.f32 %v1507, %v1530
    %v1540 = vadd.f32 %v1510, %v1535
    %1541 = vst [vmem:[#allocation3] sm:$0xff] %v1537
    %1542 = vst [vmem:[#allocation3 + $0x8] sm:$0xff] %v1538
    %1543 = vst [vmem:[#allocation3 + $0x10] sm:$0xff] %v1539
    %1544 = vst [vmem:[#allocation3 + $0x18] sm:$0xff] %v1540
    // Predicated region
    $region26: #{tpu_custom_call.1} parent=1 // pred_check
      _
    $region27: #{tpu_custom_call.1} parent=1 // pred_check_branch
      %1546 = sbr.rel (0) target = $region29
    $region28: #{tpu_custom_call.1} parent=1 // pred_region
      %s1548 = ssub.s32 512, 512
      %1549 = vsyncadd [#allocation4], %s1548
      %s1550 = sshll.u32 [#allocation3], 4
      %s1551 = int_to_ptr.vmem [resolvable:$true] %s1550
      %1556 = dma.vmem_to_hbm [thread:$0]  %s1551, 512, %s6, [#allocation4], 128, 128, 8
    $region29: #{tpu_custom_call.1} parent=1 // pred_fallthru
      _
    // Predicated region
    $region30: #{tpu_custom_call.1} parent=1 // pred_check
      _
    $region31: #{tpu_custom_call.1} parent=1 // pred_check_branch
      %1558 = sbr.rel (0) target = $region33
    $region32: #{tpu_custom_call.1} parent=1 // pred_region
      %1559 = dma.done [#allocation4], 512
    $region33: #{tpu_custom_call.1} parent=1 // pred_fallthru
      _
    %1560 = vsyncpa [#allocation4], 1

</llo_original>
